<compile_context>
chip_gen: v7x
topology: tpu7x:2x2x1
jax: 0.10.0
libtpu: 0.0.40
codegen_flags: <defaults>
</compile_context>

<pallas_src>
import jax
import jax.numpy as jnp
import numpy as np
from jax.experimental import pallas as pl
from jax.experimental.pallas import tpu as pltpu

H = 32          # LSTM hidden size per direction
H2 = 2 * H      # fused (forward + backward) state width   = 64
G = 8 * H       # fused gate width                         = 256


def _stress_kernel(x_ref,        # (B, T)  f32
                   whh_ref,      # (2H, 8H) bf16 block-diagonal recurrent weights
                   packed_ref,   # (8, 8H) f32 packed parameter slab
                   out_ref):     # (B, 2)  f32
    B, T = x_ref.shape

    x = x_ref[...]                           # (B, T)
    whh = whh_ref[...]                       # (2H, 8H) bf16
    packed = packed_ref[...]                 # (8, 8H)  f32
    wih_f = packed[0:1, :]                   # (1, 8H) fwd input weights
    wih_b = packed[1:2, :]                   # (1, 8H) bwd input weights
    bias = packed[2:3, :]                    # (1, 8H) combined biases

    h = jnp.zeros((B, H2), jnp.float32)      # [h_fwd | h_bwd]
    c = jnp.zeros((B, H2), jnp.float32)
    h_hist = [None] * T

    # Fully unrolled time loop: forward direction consumes x[:, s], backward
    # direction consumes x[:, T-1-s]; both advance inside the same fused state.
    # One (B,2H)x(2H,8H) bf16 MXU matmul per step, f32 accumulation.
    for s in range(T):
        xt_f = x[:, s:s + 1]                       # (B, 1)
        xt_b = x[:, T - 1 - s:T - s]               # (B, 1)
        # Input + bias contribution (independent of h -> off the serial chain).
        pre = xt_f * wih_f + xt_b * wih_b + bias   # (B, 8H) f32
        gates = pre + jnp.dot(h.astype(jnp.bfloat16), whh,
                              preferred_element_type=jnp.float32)  # (B, 8H)
        # Column layout: [f_f f_b | i_f i_b | o_f o_b | g_f g_b]
        sig = jax.nn.sigmoid(gates[:, :3 * H2])    # (B, 6H): f, i, o gates
        g_g = jnp.tanh(gates[:, 3 * H2:])          # (B, 2H): cell gate
        f_g = sig[:, 0:H2]                         # lane-aligned with c
        i_g = sig[:, H2:2 * H2]                    # lane-aligned with g_g
        o_g = sig[:, 2 * H2:3 * H2]                # lane-aligned with c/h
        c = f_g * c + i_g * g_g
        h = o_g * jnp.tanh(c)
        h_hist[s] = h

    # lstm_out at time t = [h_fwd(step t) | h_bwd(step T-1-t)] -- built with a
    # lane-masked select (no concat, no rotate on the critical path).
    lane = jax.lax.broadcasted_iota(jnp.int32, (1, H2), 1)
    fwd_mask = lane < H                              # (1, 2H)

    wa_row = packed[3:4, :H2]                        # (1, 2H) attention weights
    ba = packed[3:4, H2:H2 + 1]                      # (1, 1)  attention bias

    lstm_outs = [None] * T
    score_cols = [None] * T
    for t in range(T):
        lo_t = jnp.where(fwd_mask, h_hist[t], h_hist[T - 1 - t])   # (B, 2H)
        lstm_outs[t] = lo_t
        score_cols[t] = jnp.sum(lo_t * wa_row, axis=-1, keepdims=True)  # (B,1)

    # Lane-packed softmax over time: one max, one exp, one sum, approx recip.
    scores = jnp.concatenate(score_cols, axis=1) + ba              # (B, T)
    m = jnp.max(scores, axis=-1, keepdims=True)
    e = jnp.exp(scores - m)
    inv = pl.reciprocal(jnp.sum(e, axis=-1, keepdims=True), approx=True)
    w = e * inv                                                    # (B, T)

    ctx = jnp.zeros((B, H2), jnp.float32)
    for t in range(T):
        ctx = ctx + w[:, t:t + 1] * lstm_outs[t]                   # (B, 2H)

    # Final FC: out[:, j] = sum(ctx * wfc[j]) + bfc[j]
    wfc0 = packed[4:5, :H2]
    wfc1 = packed[5:6, :H2]
    b0 = packed[4:5, H2:H2 + 1]
    b1 = packed[5:6, H2:H2 + 1]
    o0 = jnp.sum(ctx * wfc0, axis=-1, keepdims=True) + b0          # (B, 1)
    o1 = jnp.sum(ctx * wfc1, axis=-1, keepdims=True) + b1          # (B, 1)
    out_ref[...] = jnp.concatenate([o0, o1], axis=1)               # (B, 2)


def _split_gates(a):
    """Split a PyTorch-ordered (4H, ...) gate tensor into i, f, g, o blocks."""
    return a[0:H], a[H:2 * H], a[2 * H:3 * H], a[3 * H:4 * H]


def prepare_params(p):
    """One-time fusion/reordering of the PyTorch parameters.

    Returns (whh_bd_bf16, packed) where
      whh_bd_bf16: (2H, 8H) block-diagonal recurrent weight, bf16
      packed:      (8, 8H) f32 slab with rows
                   [wih_f, wih_b, bias, wa|ba, wfc0|bfc0, wfc1|bfc1, 0, 0]
    Fused gate column layout: [f_f f_b | i_f i_b | o_f o_b | g_f g_b].
    """
    zv = jnp.zeros((H,), jnp.float32)
    zm = jnp.zeros((H, H), jnp.float32)

    i_f, f_f, g_f, o_f = _split_gates(p["wih_f"][:, 0])
    i_b, f_b, g_b, o_b = _split_gates(p["wih_b"][:, 0])
    wih_f_fused = jnp.concatenate([f_f, zv, i_f, zv, o_f, zv, g_f, zv])
    wih_b_fused = jnp.concatenate([zv, f_b, zv, i_b, zv, o_b, zv, g_b])

    bf = p["bih_f"] + p["bhh_f"]
    bb = p["bih_b"] + p["bhh_b"]
    bi_f, bf_f, bg_f, bo_f = _split_gates(bf)
    bi_b, bf_b, bg_b, bo_b = _split_gates(bb)
    bias_fused = jnp.concatenate(
        [bf_f, bf_b, bi_f, bi_b, bo_f, bo_b, bg_f, bg_b])

    iw_f, fw_f, gw_f, ow_f = _split_gates(p["whh_f"])    # each (H, H)
    iw_b, fw_b, gw_b, ow_b = _split_gates(p["whh_b"])
    top = jnp.concatenate([fw_f.T, zm, iw_f.T, zm, ow_f.T, zm, gw_f.T, zm],
                          axis=1)                        # (H, 8H)  h_fwd rows
    bot = jnp.concatenate([zm, fw_b.T, zm, iw_b.T, zm, ow_b.T, zm, gw_b.T],
                          axis=1)                        # (H, 8H)  h_bwd rows
    whh_bd = jnp.concatenate([top, bot], axis=0).astype(jnp.bfloat16)

    def row64(vec64, bias_scalar):
        r = jnp.zeros((G,), jnp.float32)
        r = r.at[:H2].set(vec64)
        r = r.at[H2].set(bias_scalar)
        return r

    row_wa = row64(p["wa"][0], p["ba"][0])
    row_fc0 = row64(p["wfc"][0], p["bfc"][0])
    row_fc1 = row64(p["wfc"][1], p["bfc"][1])
    zero_row = jnp.zeros((G,), jnp.float32)
    packed = jnp.stack([wih_f_fused, wih_b_fused, bias_fused,
                        row_wa, row_fc0, row_fc1, zero_row, zero_row], axis=0)
    return whh_bd, packed.astype(jnp.float32)


@jax.jit
def stress_subtype_forward(x, whh_bd, packed):
    """x: (B, T, 1) f32; whh_bd/packed from prepare_params -> (B, 2) f32."""
    B, T, _ = x.shape
    x_bt = x[..., 0]                                     # (B, T)

    return pl.pallas_call(
        _stress_kernel,
        out_shape=jax.ShapeDtypeStruct((B, 2), jnp.float32),
        grid=(1,),
        in_specs=[
            pl.BlockSpec((B, T), lambda i: (0, 0)),
            pl.BlockSpec((H2, G), lambda i: (0, 0)),
            pl.BlockSpec((8, G), lambda i: (0, 0)),
        ],
        out_specs=pl.BlockSpec((B, 2), lambda i: (0, 0)),
        compiler_params=pltpu.CompilerParams(
            dimension_semantics=("arbitrary",)),
    )(x_bt, whh_bd, packed)


def reference_forward(x, p):
    """Pure-JAX reference matching torch semantics (for validation)."""
    xb = x[..., 0]  # (B, T)
    B, T = xb.shape

    def run_dir(wih, whh, bias, reverse):
        h = jnp.zeros((B, H), jnp.float32)
        c = jnp.zeros((B, H), jnp.float32)
        outs = [None] * T
        order = range(T - 1, -1, -1) if reverse else range(T)
        for t in order:
            xt = xb[:, t:t + 1]
            gates = xt @ wih.T + h @ whh.T + bias
            i = jax.nn.sigmoid(gates[:, :H])
            f = jax.nn.sigmoid(gates[:, H:2 * H])
            g = jnp.tanh(gates[:, 2 * H:3 * H])
            o = jax.nn.sigmoid(gates[:, 3 * H:])
            c = f * c + i * g
            h = o * jnp.tanh(c)
            outs[t] = h
        return jnp.stack(outs, axis=1)  # (B, T, H)

    hf = run_dir(p["wih_f"], p["whh_f"], p["bih_f"] + p["bhh_f"], False)
    hb = run_dir(p["wih_b"], p["whh_b"], p["bih_b"] + p["bhh_b"], True)
    lstm_out = jnp.concatenate([hf, hb], axis=-1)      # (B, T, 2H)
    scores = lstm_out @ p["wa"].T + p["ba"]            # (B, T, 1)
    w = jax.nn.softmax(scores, axis=1)
    context = jnp.sum(w * lstm_out, axis=1)            # (B, 2H)
    return context @ p["wfc"].T + p["bfc"]             # (B, 2)


if __name__ == "__main__":
    B, T = 2, 8
    key = jax.random.PRNGKey(0)
    keys = jax.random.split(key, 13)

    def init(k, shape, scale=0.1):
        return (scale * jax.random.normal(k, shape)).astype(jnp.float32)

    params = dict(
        wih_f=init(keys[0], (4 * H, 1)),
        whh_f=init(keys[1], (4 * H, H)),
        bih_f=init(keys[2], (4 * H,)),
        bhh_f=init(keys[3], (4 * H,)),
        wih_b=init(keys[4], (4 * H, 1)),
        whh_b=init(keys[5], (4 * H, H)),
        bih_b=init(keys[6], (4 * H,)),
        bhh_b=init(keys[7], (4 * H,)),
        wa=init(keys[8], (1, 2 * H)),
        ba=init(keys[9], (1,)),
        wfc=init(keys[10], (2, 2 * H)),
        bfc=init(keys[11], (2,)),
    )
    x = init(keys[12], (B, T, 1), scale=1.0)

    # One-time parameter fusion (outside the jitted forward).
    whh_bd, packed = prepare_params(params)
    whh_bd = jax.block_until_ready(whh_bd)
    packed = jax.block_until_ready(packed)

    out = jax.block_until_ready(stress_subtype_forward(x, whh_bd, packed))
    ref = jax.block_until_ready(reference_forward(x, params))
    # bf16 recurrent matmul operands compound a small error over 8 steps.
    np.testing.assert_allclose(np.asarray(out), np.asarray(ref),
                               rtol=2e-2, atol=2e-2)
    print("KERNEL_OK")
</pallas_src>

<mosaic_0001>
module attributes {stable_mosaic.version = 11 : i64} {
  func.func @_stress_kernel(%arg0: i32, %arg1: memref<2x8xf32, #tpu.memory_space<vmem>>, %arg2: memref<64x256xbf16, #tpu.memory_space<vmem>>, %arg3: memref<8x256xf32, #tpu.memory_space<vmem>>, %arg4: memref<2x2xf32, #tpu.memory_space<vmem>>) attributes {dimension_semantics = [#tpu.dimension_semantics<arbitrary>], iteration_bounds = array<i64: 1>, scalar_prefetch = 0 : i64, scratch_operands = 0 : i64, tpu.core_type = #tpu.core_type<tc>, window_params = [{pipeline_mode = #tpu.pipeline_mode<synchronous>, transform_indices = @transform_0, window_bounds = array<i64: 2, 8>}, {pipeline_mode = #tpu.pipeline_mode<synchronous>, transform_indices = @transform_1, window_bounds = array<i64: 64, 256>}, {pipeline_mode = #tpu.pipeline_mode<synchronous>, transform_indices = @transform_2, window_bounds = array<i64: 8, 256>}, {pipeline_mode = #tpu.pipeline_mode<synchronous>, transform_indices = @transform_3, window_bounds = array<i64: 2, 2>}]} {
    %c0 = arith.constant 0 : index
    %c0_0 = arith.constant 0 : index
    %0 = vector.load %arg1[%c0, %c0_0] : memref<2x8xf32, #tpu.memory_space<vmem>>, vector<2x8xf32>
    %c0_1 = arith.constant 0 : index
    %c0_2 = arith.constant 0 : index
    %1 = vector.load %arg2[%c0_1, %c0_2] : memref<64x256xbf16, #tpu.memory_space<vmem>>, vector<64x256xbf16>
    %c0_3 = arith.constant 0 : index
    %c0_4 = arith.constant 0 : index
    %2 = vector.load %arg3[%c0_3, %c0_4] : memref<8x256xf32, #tpu.memory_space<vmem>>, vector<8x256xf32>
    %3 = vector.extract_strided_slice %2 {offsets = [0, 0], sizes = [1, 256], strides = [1, 1]} : vector<8x256xf32> to vector<1x256xf32>
    %4 = vector.extract_strided_slice %2 {offsets = [1, 0], sizes = [1, 256], strides = [1, 1]} : vector<8x256xf32> to vector<1x256xf32>
    %5 = vector.extract_strided_slice %2 {offsets = [2, 0], sizes = [1, 256], strides = [1, 1]} : vector<8x256xf32> to vector<1x256xf32>
    %cst = arith.constant 0.000000e+00 : f32
    %6 = vector.broadcast %cst : f32 to vector<2x64xf32>
    %cst_5 = arith.constant 0.000000e+00 : f32
    %7 = vector.broadcast %cst_5 : f32 to vector<2x64xf32>
    %8 = vector.extract_strided_slice %0 {offsets = [0, 0], sizes = [2, 1], strides = [1, 1]} : vector<2x8xf32> to vector<2x1xf32>
    %9 = vector.extract_strided_slice %0 {offsets = [0, 7], sizes = [2, 1], strides = [1, 1]} : vector<2x8xf32> to vector<2x1xf32>
    %10 = vector.broadcast %8 : vector<2x1xf32> to vector<2x256xf32>
    %11 = vector.broadcast %3 : vector<1x256xf32> to vector<2x256xf32>
    %12 = arith.mulf %10, %11 : vector<2x256xf32>
    %13 = vector.broadcast %9 : vector<2x1xf32> to vector<2x256xf32>
    %14 = vector.broadcast %4 : vector<1x256xf32> to vector<2x256xf32>
    %15 = arith.mulf %13, %14 : vector<2x256xf32>
    %16 = arith.addf %12, %15 : vector<2x256xf32>
    %17 = vector.broadcast %5 : vector<1x256xf32> to vector<2x256xf32>
    %18 = arith.addf %16, %17 : vector<2x256xf32>
    %19 = arith.truncf %6 : vector<2x64xf32> to vector<2x64xbf16>
    %cst_6 = arith.constant dense<0.000000e+00> : vector<2x256xf32>
    %20 = tpu.matmul %19, %1, %cst_6 {dimension_numbers = #tpu.dot_dimension_numbers<[1], [0], [0], [1], [0, 0, 1, 1], [], []>} : vector<2x64xbf16>, vector<64x256xbf16>, vector<2x256xf32> -> vector<2x256xf32>
    %21 = arith.addf %18, %20 : vector<2x256xf32>
    %22 = vector.extract_strided_slice %21 {offsets = [0, 0], sizes = [2, 192], strides = [1, 1]} : vector<2x256xf32> to vector<2x192xf32>
    %23 = arith.negf %22 : vector<2x192xf32>
    %24 = math.exp %23 : vector<2x192xf32>
    %cst_7 = arith.constant 1.000000e+00 : f32
    %25 = vector.broadcast %cst_7 : f32 to vector<2x192xf32>
    %26 = arith.addf %25, %24 : vector<2x192xf32>
    %27 = arith.divf %25, %26 : vector<2x192xf32>
    %28 = vector.extract_strided_slice %21 {offsets = [0, 192], sizes = [2, 64], strides = [1, 1]} : vector<2x256xf32> to vector<2x64xf32>
    %29 = math.tanh %28 : vector<2x64xf32>
    %30 = vector.extract_strided_slice %27 {offsets = [0, 0], sizes = [2, 64], strides = [1, 1]} : vector<2x192xf32> to vector<2x64xf32>
    %31 = vector.extract_strided_slice %27 {offsets = [0, 64], sizes = [2, 64], strides = [1, 1]} : vector<2x192xf32> to vector<2x64xf32>
    %32 = vector.extract_strided_slice %27 {offsets = [0, 128], sizes = [2, 64], strides = [1, 1]} : vector<2x192xf32> to vector<2x64xf32>
    %33 = arith.mulf %30, %7 : vector<2x64xf32>
    %34 = arith.mulf %31, %29 : vector<2x64xf32>
    %35 = arith.addf %33, %34 : vector<2x64xf32>
    %36 = math.tanh %35 : vector<2x64xf32>
    %37 = arith.mulf %32, %36 : vector<2x64xf32>
    %38 = vector.extract_strided_slice %0 {offsets = [0, 1], sizes = [2, 1], strides = [1, 1]} : vector<2x8xf32> to vector<2x1xf32>
    %39 = vector.extract_strided_slice %0 {offsets = [0, 6], sizes = [2, 1], strides = [1, 1]} : vector<2x8xf32> to vector<2x1xf32>
    %40 = vector.broadcast %38 : vector<2x1xf32> to vector<2x256xf32>
    %41 = vector.broadcast %3 : vector<1x256xf32> to vector<2x256xf32>
    %42 = arith.mulf %40, %41 : vector<2x256xf32>
    %43 = vector.broadcast %39 : vector<2x1xf32> to vector<2x256xf32>
    %44 = vector.broadcast %4 : vector<1x256xf32> to vector<2x256xf32>
    %45 = arith.mulf %43, %44 : vector<2x256xf32>
    %46 = arith.addf %42, %45 : vector<2x256xf32>
    %47 = vector.broadcast %5 : vector<1x256xf32> to vector<2x256xf32>
    %48 = arith.addf %46, %47 : vector<2x256xf32>
    %49 = arith.truncf %37 : vector<2x64xf32> to vector<2x64xbf16>
    %cst_8 = arith.constant dense<0.000000e+00> : vector<2x256xf32>
    %50 = tpu.matmul %49, %1, %cst_8 {dimension_numbers = #tpu.dot_dimension_numbers<[1], [0], [0], [1], [0, 0, 1, 1], [], []>} : vector<2x64xbf16>, vector<64x256xbf16>, vector<2x256xf32> -> vector<2x256xf32>
    %51 = arith.addf %48, %50 : vector<2x256xf32>
    %52 = vector.extract_strided_slice %51 {offsets = [0, 0], sizes = [2, 192], strides = [1, 1]} : vector<2x256xf32> to vector<2x192xf32>
    %53 = arith.negf %52 : vector<2x192xf32>
    %54 = math.exp %53 : vector<2x192xf32>
    %cst_9 = arith.constant 1.000000e+00 : f32
    %55 = vector.broadcast %cst_9 : f32 to vector<2x192xf32>
    %56 = arith.addf %55, %54 : vector<2x192xf32>
    %57 = arith.divf %55, %56 : vector<2x192xf32>
    %58 = vector.extract_strided_slice %51 {offsets = [0, 192], sizes = [2, 64], strides = [1, 1]} : vector<2x256xf32> to vector<2x64xf32>
    %59 = math.tanh %58 : vector<2x64xf32>
    %60 = vector.extract_strided_slice %57 {offsets = [0, 0], sizes = [2, 64], strides = [1, 1]} : vector<2x192xf32> to vector<2x64xf32>
    %61 = vector.extract_strided_slice %57 {offsets = [0, 64], sizes = [2, 64], strides = [1, 1]} : vector<2x192xf32> to vector<2x64xf32>
    %62 = vector.extract_strided_slice %57 {offsets = [0, 128], sizes = [2, 64], strides = [1, 1]} : vector<2x192xf32> to vector<2x64xf32>
    %63 = arith.mulf %60, %35 : vector<2x64xf32>
    %64 = arith.mulf %61, %59 : vector<2x64xf32>
    %65 = arith.addf %63, %64 : vector<2x64xf32>
    %66 = math.tanh %65 : vector<2x64xf32>
    %67 = arith.mulf %62, %66 : vector<2x64xf32>
    %68 = vector.extract_strided_slice %0 {offsets = [0, 2], sizes = [2, 1], strides = [1, 1]} : vector<2x8xf32> to vector<2x1xf32>
    %69 = vector.extract_strided_slice %0 {offsets = [0, 5], sizes = [2, 1], strides = [1, 1]} : vector<2x8xf32> to vector<2x1xf32>
    %70 = vector.broadcast %68 : vector<2x1xf32> to vector<2x256xf32>
    %71 = vector.broadcast %3 : vector<1x256xf32> to vector<2x256xf32>
    %72 = arith.mulf %70, %71 : vector<2x256xf32>
    %73 = vector.broadcast %69 : vector<2x1xf32> to vector<2x256xf32>
    %74 = vector.broadcast %4 : vector<1x256xf32> to vector<2x256xf32>
    %75 = arith.mulf %73, %74 : vector<2x256xf32>
    %76 = arith.addf %72, %75 : vector<2x256xf32>
    %77 = vector.broadcast %5 : vector<1x256xf32> to vector<2x256xf32>
    %78 = arith.addf %76, %77 : vector<2x256xf32>
    %79 = arith.truncf %67 : vector<2x64xf32> to vector<2x64xbf16>
    %cst_10 = arith.constant dense<0.000000e+00> : vector<2x256xf32>
    %80 = tpu.matmul %79, %1, %cst_10 {dimension_numbers = #tpu.dot_dimension_numbers<[1], [0], [0], [1], [0, 0, 1, 1], [], []>} : vector<2x64xbf16>, vector<64x256xbf16>, vector<2x256xf32> -> vector<2x256xf32>
    %81 = arith.addf %78, %80 : vector<2x256xf32>
    %82 = vector.extract_strided_slice %81 {offsets = [0, 0], sizes = [2, 192], strides = [1, 1]} : vector<2x256xf32> to vector<2x192xf32>
    %83 = arith.negf %82 : vector<2x192xf32>
    %84 = math.exp %83 : vector<2x192xf32>
    %cst_11 = arith.constant 1.000000e+00 : f32
    %85 = vector.broadcast %cst_11 : f32 to vector<2x192xf32>
    %86 = arith.addf %85, %84 : vector<2x192xf32>
    %87 = arith.divf %85, %86 : vector<2x192xf32>
    %88 = vector.extract_strided_slice %81 {offsets = [0, 192], sizes = [2, 64], strides = [1, 1]} : vector<2x256xf32> to vector<2x64xf32>
    %89 = math.tanh %88 : vector<2x64xf32>
    %90 = vector.extract_strided_slice %87 {offsets = [0, 0], sizes = [2, 64], strides = [1, 1]} : vector<2x192xf32> to vector<2x64xf32>
    %91 = vector.extract_strided_slice %87 {offsets = [0, 64], sizes = [2, 64], strides = [1, 1]} : vector<2x192xf32> to vector<2x64xf32>
    %92 = vector.extract_strided_slice %87 {offsets = [0, 128], sizes = [2, 64], strides = [1, 1]} : vector<2x192xf32> to vector<2x64xf32>
    %93 = arith.mulf %90, %65 : vector<2x64xf32>
    %94 = arith.mulf %91, %89 : vector<2x64xf32>
    %95 = arith.addf %93, %94 : vector<2x64xf32>
    %96 = math.tanh %95 : vector<2x64xf32>
    %97 = arith.mulf %92, %96 : vector<2x64xf32>
    %98 = vector.extract_strided_slice %0 {offsets = [0, 3], sizes = [2, 1], strides = [1, 1]} : vector<2x8xf32> to vector<2x1xf32>
    %99 = vector.extract_strided_slice %0 {offsets = [0, 4], sizes = [2, 1], strides = [1, 1]} : vector<2x8xf32> to vector<2x1xf32>
    %100 = vector.broadcast %98 : vector<2x1xf32> to vector<2x256xf32>
    %101 = vector.broadcast %3 : vector<1x256xf32> to vector<2x256xf32>
    %102 = arith.mulf %100, %101 : vector<2x256xf32>
    %103 = vector.broadcast %99 : vector<2x1xf32> to vector<2x256xf32>
    %104 = vector.broadcast %4 : vector<1x256xf32> to vector<2x256xf32>
    %105 = arith.mulf %103, %104 : vector<2x256xf32>
    %106 = arith.addf %102, %105 : vector<2x256xf32>
    %107 = vector.broadcast %5 : vector<1x256xf32> to vector<2x256xf32>
    %108 = arith.addf %106, %107 : vector<2x256xf32>
    %109 = arith.truncf %97 : vector<2x64xf32> to vector<2x64xbf16>
    %cst_12 = arith.constant dense<0.000000e+00> : vector<2x256xf32>
    %110 = tpu.matmul %109, %1, %cst_12 {dimension_numbers = #tpu.dot_dimension_numbers<[1], [0], [0], [1], [0, 0, 1, 1], [], []>} : vector<2x64xbf16>, vector<64x256xbf16>, vector<2x256xf32> -> vector<2x256xf32>
    %111 = arith.addf %108, %110 : vector<2x256xf32>
    %112 = vector.extract_strided_slice %111 {offsets = [0, 0], sizes = [2, 192], strides = [1, 1]} : vector<2x256xf32> to vector<2x192xf32>
    %113 = arith.negf %112 : vector<2x192xf32>
    %114 = math.exp %113 : vector<2x192xf32>
    %cst_13 = arith.constant 1.000000e+00 : f32
    %115 = vector.broadcast %cst_13 : f32 to vector<2x192xf32>
    %116 = arith.addf %115, %114 : vector<2x192xf32>
    %117 = arith.divf %115, %116 : vector<2x192xf32>
    %118 = vector.extract_strided_slice %111 {offsets = [0, 192], sizes = [2, 64], strides = [1, 1]} : vector<2x256xf32> to vector<2x64xf32>
    %119 = math.tanh %118 : vector<2x64xf32>
    %120 = vector.extract_strided_slice %117 {offsets = [0, 0], sizes = [2, 64], strides = [1, 1]} : vector<2x192xf32> to vector<2x64xf32>
    %121 = vector.extract_strided_slice %117 {offsets = [0, 64], sizes = [2, 64], strides = [1, 1]} : vector<2x192xf32> to vector<2x64xf32>
    %122 = vector.extract_strided_slice %117 {offsets = [0, 128], sizes = [2, 64], strides = [1, 1]} : vector<2x192xf32> to vector<2x64xf32>
    %123 = arith.mulf %120, %95 : vector<2x64xf32>
    %124 = arith.mulf %121, %119 : vector<2x64xf32>
    %125 = arith.addf %123, %124 : vector<2x64xf32>
    %126 = math.tanh %125 : vector<2x64xf32>
    %127 = arith.mulf %122, %126 : vector<2x64xf32>
    %128 = vector.extract_strided_slice %0 {offsets = [0, 4], sizes = [2, 1], strides = [1, 1]} : vector<2x8xf32> to vector<2x1xf32>
    %129 = vector.extract_strided_slice %0 {offsets = [0, 3], sizes = [2, 1], strides = [1, 1]} : vector<2x8xf32> to vector<2x1xf32>
    %130 = vector.broadcast %128 : vector<2x1xf32> to vector<2x256xf32>
    %131 = vector.broadcast %3 : vector<1x256xf32> to vector<2x256xf32>
    %132 = arith.mulf %130, %131 : vector<2x256xf32>
    %133 = vector.broadcast %129 : vector<2x1xf32> to vector<2x256xf32>
    %134 = vector.broadcast %4 : vector<1x256xf32> to vector<2x256xf32>
    %135 = arith.mulf %133, %134 : vector<2x256xf32>
    %136 = arith.addf %132, %135 : vector<2x256xf32>
    %137 = vector.broadcast %5 : vector<1x256xf32> to vector<2x256xf32>
    %138 = arith.addf %136, %137 : vector<2x256xf32>
    %139 = arith.truncf %127 : vector<2x64xf32> to vector<2x64xbf16>
    %cst_14 = arith.constant dense<0.000000e+00> : vector<2x256xf32>
    %140 = tpu.matmul %139, %1, %cst_14 {dimension_numbers = #tpu.dot_dimension_numbers<[1], [0], [0], [1], [0, 0, 1, 1], [], []>} : vector<2x64xbf16>, vector<64x256xbf16>, vector<2x256xf32> -> vector<2x256xf32>
    %141 = arith.addf %138, %140 : vector<2x256xf32>
    %142 = vector.extract_strided_slice %141 {offsets = [0, 0], sizes = [2, 192], strides = [1, 1]} : vector<2x256xf32> to vector<2x192xf32>
    %143 = arith.negf %142 : vector<2x192xf32>
    %144 = math.exp %143 : vector<2x192xf32>
    %cst_15 = arith.constant 1.000000e+00 : f32
    %145 = vector.broadcast %cst_15 : f32 to vector<2x192xf32>
    %146 = arith.addf %145, %144 : vector<2x192xf32>
    %147 = arith.divf %145, %146 : vector<2x192xf32>
    %148 = vector.extract_strided_slice %141 {offsets = [0, 192], sizes = [2, 64], strides = [1, 1]} : vector<2x256xf32> to vector<2x64xf32>
    %149 = math.tanh %148 : vector<2x64xf32>
    %150 = vector.extract_strided_slice %147 {offsets = [0, 0], sizes = [2, 64], strides = [1, 1]} : vector<2x192xf32> to vector<2x64xf32>
    %151 = vector.extract_strided_slice %147 {offsets = [0, 64], sizes = [2, 64], strides = [1, 1]} : vector<2x192xf32> to vector<2x64xf32>
    %152 = vector.extract_strided_slice %147 {offsets = [0, 128], sizes = [2, 64], strides = [1, 1]} : vector<2x192xf32> to vector<2x64xf32>
    %153 = arith.mulf %150, %125 : vector<2x64xf32>
    %154 = arith.mulf %151, %149 : vector<2x64xf32>
    %155 = arith.addf %153, %154 : vector<2x64xf32>
    %156 = math.tanh %155 : vector<2x64xf32>
    %157 = arith.mulf %152, %156 : vector<2x64xf32>
    %158 = vector.extract_strided_slice %0 {offsets = [0, 5], sizes = [2, 1], strides = [1, 1]} : vector<2x8xf32> to vector<2x1xf32>
    %159 = vector.extract_strided_slice %0 {offsets = [0, 2], sizes = [2, 1], strides = [1, 1]} : vector<2x8xf32> to vector<2x1xf32>
    %160 = vector.broadcast %158 : vector<2x1xf32> to vector<2x256xf32>
    %161 = vector.broadcast %3 : vector<1x256xf32> to vector<2x256xf32>
    %162 = arith.mulf %160, %161 : vector<2x256xf32>
    %163 = vector.broadcast %159 : vector<2x1xf32> to vector<2x256xf32>
    %164 = vector.broadcast %4 : vector<1x256xf32> to vector<2x256xf32>
    %165 = arith.mulf %163, %164 : vector<2x256xf32>
    %166 = arith.addf %162, %165 : vector<2x256xf32>
    %167 = vector.broadcast %5 : vector<1x256xf32> to vector<2x256xf32>
    %168 = arith.addf %166, %167 : vector<2x256xf32>
    %169 = arith.truncf %157 : vector<2x64xf32> to vector<2x64xbf16>
    %cst_16 = arith.constant dense<0.000000e+00> : vector<2x256xf32>
    %170 = tpu.matmul %169, %1, %cst_16 {dimension_numbers = #tpu.dot_dimension_numbers<[1], [0], [0], [1], [0, 0, 1, 1], [], []>} : vector<2x64xbf16>, vector<64x256xbf16>, vector<2x256xf32> -> vector<2x256xf32>
    %171 = arith.addf %168, %170 : vector<2x256xf32>
    %172 = vector.extract_strided_slice %171 {offsets = [0, 0], sizes = [2, 192], strides = [1, 1]} : vector<2x256xf32> to vector<2x192xf32>
    %173 = arith.negf %172 : vector<2x192xf32>
    %174 = math.exp %173 : vector<2x192xf32>
    %cst_17 = arith.constant 1.000000e+00 : f32
    %175 = vector.broadcast %cst_17 : f32 to vector<2x192xf32>
    %176 = arith.addf %175, %174 : vector<2x192xf32>
    %177 = arith.divf %175, %176 : vector<2x192xf32>
    %178 = vector.extract_strided_slice %171 {offsets = [0, 192], sizes = [2, 64], strides = [1, 1]} : vector<2x256xf32> to vector<2x64xf32>
    %179 = math.tanh %178 : vector<2x64xf32>
    %180 = vector.extract_strided_slice %177 {offsets = [0, 0], sizes = [2, 64], strides = [1, 1]} : vector<2x192xf32> to vector<2x64xf32>
    %181 = vector.extract_strided_slice %177 {offsets = [0, 64], sizes = [2, 64], strides = [1, 1]} : vector<2x192xf32> to vector<2x64xf32>
    %182 = vector.extract_strided_slice %177 {offsets = [0, 128], sizes = [2, 64], strides = [1, 1]} : vector<2x192xf32> to vector<2x64xf32>
    %183 = arith.mulf %180, %155 : vector<2x64xf32>
    %184 = arith.mulf %181, %179 : vector<2x64xf32>
    %185 = arith.addf %183, %184 : vector<2x64xf32>
    %186 = math.tanh %185 : vector<2x64xf32>
    %187 = arith.mulf %182, %186 : vector<2x64xf32>
    %188 = vector.extract_strided_slice %0 {offsets = [0, 6], sizes = [2, 1], strides = [1, 1]} : vector<2x8xf32> to vector<2x1xf32>
    %189 = vector.extract_strided_slice %0 {offsets = [0, 1], sizes = [2, 1], strides = [1, 1]} : vector<2x8xf32> to vector<2x1xf32>
    %190 = vector.broadcast %188 : vector<2x1xf32> to vector<2x256xf32>
    %191 = vector.broadcast %3 : vector<1x256xf32> to vector<2x256xf32>
    %192 = arith.mulf %190, %191 : vector<2x256xf32>
    %193 = vector.broadcast %189 : vector<2x1xf32> to vector<2x256xf32>
    %194 = vector.broadcast %4 : vector<1x256xf32> to vector<2x256xf32>
    %195 = arith.mulf %193, %194 : vector<2x256xf32>
    %196 = arith.addf %192, %195 : vector<2x256xf32>
    %197 = vector.broadcast %5 : vector<1x256xf32> to vector<2x256xf32>
    %198 = arith.addf %196, %197 : vector<2x256xf32>
    %199 = arith.truncf %187 : vector<2x64xf32> to vector<2x64xbf16>
    %cst_18 = arith.constant dense<0.000000e+00> : vector<2x256xf32>
    %200 = tpu.matmul %199, %1, %cst_18 {dimension_numbers = #tpu.dot_dimension_numbers<[1], [0], [0], [1], [0, 0, 1, 1], [], []>} : vector<2x64xbf16>, vector<64x256xbf16>, vector<2x256xf32> -> vector<2x256xf32>
    %201 = arith.addf %198, %200 : vector<2x256xf32>
    %202 = vector.extract_strided_slice %201 {offsets = [0, 0], sizes = [2, 192], strides = [1, 1]} : vector<2x256xf32> to vector<2x192xf32>
    %203 = arith.negf %202 : vector<2x192xf32>
    %204 = math.exp %203 : vector<2x192xf32>
    %cst_19 = arith.constant 1.000000e+00 : f32
    %205 = vector.broadcast %cst_19 : f32 to vector<2x192xf32>
    %206 = arith.addf %205, %204 : vector<2x192xf32>
    %207 = arith.divf %205, %206 : vector<2x192xf32>
    %208 = vector.extract_strided_slice %201 {offsets = [0, 192], sizes = [2, 64], strides = [1, 1]} : vector<2x256xf32> to vector<2x64xf32>
    %209 = math.tanh %208 : vector<2x64xf32>
    %210 = vector.extract_strided_slice %207 {offsets = [0, 0], sizes = [2, 64], strides = [1, 1]} : vector<2x192xf32> to vector<2x64xf32>
    %211 = vector.extract_strided_slice %207 {offsets = [0, 64], sizes = [2, 64], strides = [1, 1]} : vector<2x192xf32> to vector<2x64xf32>
    %212 = vector.extract_strided_slice %207 {offsets = [0, 128], sizes = [2, 64], strides = [1, 1]} : vector<2x192xf32> to vector<2x64xf32>
    %213 = arith.mulf %210, %185 : vector<2x64xf32>
    %214 = arith.mulf %211, %209 : vector<2x64xf32>
    %215 = arith.addf %213, %214 : vector<2x64xf32>
    %216 = math.tanh %215 : vector<2x64xf32>
    %217 = arith.mulf %212, %216 : vector<2x64xf32>
    %218 = vector.extract_strided_slice %0 {offsets = [0, 7], sizes = [2, 1], strides = [1, 1]} : vector<2x8xf32> to vector<2x1xf32>
    %219 = vector.extract_strided_slice %0 {offsets = [0, 0], sizes = [2, 1], strides = [1, 1]} : vector<2x8xf32> to vector<2x1xf32>
    %220 = vector.broadcast %218 : vector<2x1xf32> to vector<2x256xf32>
    %221 = vector.broadcast %3 : vector<1x256xf32> to vector<2x256xf32>
    %222 = arith.mulf %220, %221 : vector<2x256xf32>
    %223 = vector.broadcast %219 : vector<2x1xf32> to vector<2x256xf32>
    %224 = vector.broadcast %4 : vector<1x256xf32> to vector<2x256xf32>
    %225 = arith.mulf %223, %224 : vector<2x256xf32>
    %226 = arith.addf %222, %225 : vector<2x256xf32>
    %227 = vector.broadcast %5 : vector<1x256xf32> to vector<2x256xf32>
    %228 = arith.addf %226, %227 : vector<2x256xf32>
    %229 = arith.truncf %217 : vector<2x64xf32> to vector<2x64xbf16>
    %cst_20 = arith.constant dense<0.000000e+00> : vector<2x256xf32>
    %230 = tpu.matmul %229, %1, %cst_20 {dimension_numbers = #tpu.dot_dimension_numbers<[1], [0], [0], [1], [0, 0, 1, 1], [], []>} : vector<2x64xbf16>, vector<64x256xbf16>, vector<2x256xf32> -> vector<2x256xf32>
    %231 = arith.addf %228, %230 : vector<2x256xf32>
    %232 = vector.extract_strided_slice %231 {offsets = [0, 0], sizes = [2, 192], strides = [1, 1]} : vector<2x256xf32> to vector<2x192xf32>
    %233 = arith.negf %232 : vector<2x192xf32>
    %234 = math.exp %233 : vector<2x192xf32>
    %cst_21 = arith.constant 1.000000e+00 : f32
    %235 = vector.broadcast %cst_21 : f32 to vector<2x192xf32>
    %236 = arith.addf %235, %234 : vector<2x192xf32>
    %237 = arith.divf %235, %236 : vector<2x192xf32>
    %238 = vector.extract_strided_slice %231 {offsets = [0, 192], sizes = [2, 64], strides = [1, 1]} : vector<2x256xf32> to vector<2x64xf32>
    %239 = math.tanh %238 : vector<2x64xf32>
    %240 = vector.extract_strided_slice %237 {offsets = [0, 0], sizes = [2, 64], strides = [1, 1]} : vector<2x192xf32> to vector<2x64xf32>
    %241 = vector.extract_strided_slice %237 {offsets = [0, 64], sizes = [2, 64], strides = [1, 1]} : vector<2x192xf32> to vector<2x64xf32>
    %242 = vector.extract_strided_slice %237 {offsets = [0, 128], sizes = [2, 64], strides = [1, 1]} : vector<2x192xf32> to vector<2x64xf32>
    %243 = arith.mulf %240, %215 : vector<2x64xf32>
    %244 = arith.mulf %241, %239 : vector<2x64xf32>
    %245 = arith.addf %243, %244 : vector<2x64xf32>
    %246 = math.tanh %245 : vector<2x64xf32>
    %247 = arith.mulf %242, %246 : vector<2x64xf32>
    %248 = tpu.iota {dimensions = array<i32: 1>} : vector<1x64xi32>
    %c32_i32 = arith.constant 32 : i32
    %249 = vector.broadcast %c32_i32 : i32 to vector<1x64xi32>
    %250 = arith.cmpi slt, %248, %249 : vector<1x64xi32>
    %251 = vector.extract_strided_slice %2 {offsets = [3, 0], sizes = [1, 64], strides = [1, 1]} : vector<8x256xf32> to vector<1x64xf32>
    %252 = vector.extract_strided_slice %2 {offsets = [3, 64], sizes = [1, 1], strides = [1, 1]} : vector<8x256xf32> to vector<1x1xf32>
    %253 = vector.shape_cast %250 : vector<1x64xi1> to vector<1x64xi1>
    %254 = vector.broadcast %253 : vector<1x64xi1> to vector<2x64xi1>
    %255 = arith.select %254, %37, %247 : vector<2x64xi1>, vector<2x64xf32>
    %256 = vector.broadcast %251 : vector<1x64xf32> to vector<2x64xf32>
    %257 = arith.mulf %255, %256 : vector<2x64xf32>
    %cst_22 = arith.constant dense<0.000000e+00> : vector<2xf32>
    %258 = vector.multi_reduction <add>, %257, %cst_22 [1] : vector<2x64xf32> to vector<2xf32>
    %259 = vector.shape_cast %258 : vector<2xf32> to vector<2x1xf32>
    %260 = vector.shape_cast %250 : vector<1x64xi1> to vector<1x64xi1>
    %261 = vector.broadcast %260 : vector<1x64xi1> to vector<2x64xi1>
    %262 = arith.select %261, %67, %217 : vector<2x64xi1>, vector<2x64xf32>
    %263 = vector.broadcast %251 : vector<1x64xf32> to vector<2x64xf32>
    %264 = arith.mulf %262, %263 : vector<2x64xf32>
    %cst_23 = arith.constant dense<0.000000e+00> : vector<2xf32>
    %265 = vector.multi_reduction <add>, %264, %cst_23 [1] : vector<2x64xf32> to vector<2xf32>
    %266 = vector.shape_cast %265 : vector<2xf32> to vector<2x1xf32>
    %267 = vector.shape_cast %250 : vector<1x64xi1> to vector<1x64xi1>
    %268 = vector.broadcast %267 : vector<1x64xi1> to vector<2x64xi1>
    %269 = arith.select %268, %97, %187 : vector<2x64xi1>, vector<2x64xf32>
    %270 = vector.broadcast %251 : vector<1x64xf32> to vector<2x64xf32>
    %271 = arith.mulf %269, %270 : vector<2x64xf32>
    %cst_24 = arith.constant dense<0.000000e+00> : vector<2xf32>
    %272 = vector.multi_reduction <add>, %271, %cst_24 [1] : vector<2x64xf32> to vector<2xf32>
    %273 = vector.shape_cast %272 : vector<2xf32> to vector<2x1xf32>
    %274 = vector.shape_cast %250 : vector<1x64xi1> to vector<1x64xi1>
    %275 = vector.broadcast %274 : vector<1x64xi1> to vector<2x64xi1>
    %276 = arith.select %275, %127, %157 : vector<2x64xi1>, vector<2x64xf32>
    %277 = vector.broadcast %251 : vector<1x64xf32> to vector<2x64xf32>
    %278 = arith.mulf %276, %277 : vector<2x64xf32>
    %cst_25 = arith.constant dense<0.000000e+00> : vector<2xf32>
    %279 = vector.multi_reduction <add>, %278, %cst_25 [1] : vector<2x64xf32> to vector<2xf32>
    %280 = vector.shape_cast %279 : vector<2xf32> to vector<2x1xf32>
    %281 = vector.shape_cast %250 : vector<1x64xi1> to vector<1x64xi1>
    %282 = vector.broadcast %281 : vector<1x64xi1> to vector<2x64xi1>
    %283 = arith.select %282, %157, %127 : vector<2x64xi1>, vector<2x64xf32>
    %284 = vector.broadcast %251 : vector<1x64xf32> to vector<2x64xf32>
    %285 = arith.mulf %283, %284 : vector<2x64xf32>
    %cst_26 = arith.constant dense<0.000000e+00> : vector<2xf32>
    %286 = vector.multi_reduction <add>, %285, %cst_26 [1] : vector<2x64xf32> to vector<2xf32>
    %287 = vector.shape_cast %286 : vector<2xf32> to vector<2x1xf32>
    %288 = vector.shape_cast %250 : vector<1x64xi1> to vector<1x64xi1>
    %289 = vector.broadcast %288 : vector<1x64xi1> to vector<2x64xi1>
    %290 = arith.select %289, %187, %97 : vector<2x64xi1>, vector<2x64xf32>
    %291 = vector.broadcast %251 : vector<1x64xf32> to vector<2x64xf32>
    %292 = arith.mulf %290, %291 : vector<2x64xf32>
    %cst_27 = arith.constant dense<0.000000e+00> : vector<2xf32>
    %293 = vector.multi_reduction <add>, %292, %cst_27 [1] : vector<2x64xf32> to vector<2xf32>
    %294 = vector.shape_cast %293 : vector<2xf32> to vector<2x1xf32>
    %295 = vector.shape_cast %250 : vector<1x64xi1> to vector<1x64xi1>
    %296 = vector.broadcast %295 : vector<1x64xi1> to vector<2x64xi1>
    %297 = arith.select %296, %217, %67 : vector<2x64xi1>, vector<2x64xf32>
    %298 = vector.broadcast %251 : vector<1x64xf32> to vector<2x64xf32>
    %299 = arith.mulf %297, %298 : vector<2x64xf32>
    %cst_28 = arith.constant dense<0.000000e+00> : vector<2xf32>
    %300 = vector.multi_reduction <add>, %299, %cst_28 [1] : vector<2x64xf32> to vector<2xf32>
    %301 = vector.shape_cast %300 : vector<2xf32> to vector<2x1xf32>
    %302 = vector.shape_cast %250 : vector<1x64xi1> to vector<1x64xi1>
    %303 = vector.broadcast %302 : vector<1x64xi1> to vector<2x64xi1>
    %304 = arith.select %303, %247, %37 : vector<2x64xi1>, vector<2x64xf32>
    %305 = vector.broadcast %251 : vector<1x64xf32> to vector<2x64xf32>
    %306 = arith.mulf %304, %305 : vector<2x64xf32>
    %cst_29 = arith.constant dense<0.000000e+00> : vector<2xf32>
    %307 = vector.multi_reduction <add>, %306, %cst_29 [1] : vector<2x64xf32> to vector<2xf32>
    %308 = vector.shape_cast %307 : vector<2xf32> to vector<2x1xf32>
    %309 = tpu.concatenate %259, %266, %273, %280, %287, %294, %301, %308 in 1 : vector<2x1xf32>, vector<2x1xf32>, vector<2x1xf32>, vector<2x1xf32>, vector<2x1xf32>, vector<2x1xf32>, vector<2x1xf32>, vector<2x1xf32> -> vector<2x8xf32>
    %310 = vector.broadcast %252 : vector<1x1xf32> to vector<2x8xf32>
    %311 = arith.addf %309, %310 : vector<2x8xf32>
    %cst_30 = arith.constant dense<0xFF800000> : vector<2xf32>
    %312 = vector.multi_reduction <maximumf>, %311, %cst_30 [1] : vector<2x8xf32> to vector<2xf32>
    %313 = vector.shape_cast %312 : vector<2xf32> to vector<2x1xf32>
    %314 = vector.broadcast %313 : vector<2x1xf32> to vector<2x8xf32>
    %315 = arith.subf %311, %314 : vector<2x8xf32>
    %316 = math.exp %315 : vector<2x8xf32>
    %cst_31 = arith.constant dense<0.000000e+00> : vector<2xf32>
    %317 = vector.multi_reduction <add>, %316, %cst_31 [1] : vector<2x8xf32> to vector<2xf32>
    %318 = vector.shape_cast %317 : vector<2xf32> to vector<2x1xf32>
    %319 = tpu.reciprocal %318 {approx = true} : vector<2x1xf32> -> vector<2x1xf32>
    %320 = vector.broadcast %319 : vector<2x1xf32> to vector<2x8xf32>
    %321 = arith.mulf %316, %320 : vector<2x8xf32>
    %cst_32 = arith.constant 0.000000e+00 : f32
    %322 = vector.broadcast %cst_32 : f32 to vector<2x64xf32>
    %323 = vector.extract_strided_slice %321 {offsets = [0, 0], sizes = [2, 1], strides = [1, 1]} : vector<2x8xf32> to vector<2x1xf32>
    %324 = vector.broadcast %323 : vector<2x1xf32> to vector<2x64xf32>
    %325 = arith.mulf %324, %255 : vector<2x64xf32>
    %326 = arith.addf %322, %325 : vector<2x64xf32>
    %327 = vector.extract_strided_slice %321 {offsets = [0, 1], sizes = [2, 1], strides = [1, 1]} : vector<2x8xf32> to vector<2x1xf32>
    %328 = vector.broadcast %327 : vector<2x1xf32> to vector<2x64xf32>
    %329 = arith.mulf %328, %262 : vector<2x64xf32>
    %330 = arith.addf %326, %329 : vector<2x64xf32>
    %331 = vector.extract_strided_slice %321 {offsets = [0, 2], sizes = [2, 1], strides = [1, 1]} : vector<2x8xf32> to vector<2x1xf32>
    %332 = vector.broadcast %331 : vector<2x1xf32> to vector<2x64xf32>
    %333 = arith.mulf %332, %269 : vector<2x64xf32>
    %334 = arith.addf %330, %333 : vector<2x64xf32>
    %335 = vector.extract_strided_slice %321 {offsets = [0, 3], sizes = [2, 1], strides = [1, 1]} : vector<2x8xf32> to vector<2x1xf32>
    %336 = vector.broadcast %335 : vector<2x1xf32> to vector<2x64xf32>
    %337 = arith.mulf %336, %276 : vector<2x64xf32>
    %338 = arith.addf %334, %337 : vector<2x64xf32>
    %339 = vector.extract_strided_slice %321 {offsets = [0, 4], sizes = [2, 1], strides = [1, 1]} : vector<2x8xf32> to vector<2x1xf32>
    %340 = vector.broadcast %339 : vector<2x1xf32> to vector<2x64xf32>
    %341 = arith.mulf %340, %283 : vector<2x64xf32>
    %342 = arith.addf %338, %341 : vector<2x64xf32>
    %343 = vector.extract_strided_slice %321 {offsets = [0, 5], sizes = [2, 1], strides = [1, 1]} : vector<2x8xf32> to vector<2x1xf32>
    %344 = vector.broadcast %343 : vector<2x1xf32> to vector<2x64xf32>
    %345 = arith.mulf %344, %290 : vector<2x64xf32>
    %346 = arith.addf %342, %345 : vector<2x64xf32>
    %347 = vector.extract_strided_slice %321 {offsets = [0, 6], sizes = [2, 1], strides = [1, 1]} : vector<2x8xf32> to vector<2x1xf32>
    %348 = vector.broadcast %347 : vector<2x1xf32> to vector<2x64xf32>
    %349 = arith.mulf %348, %297 : vector<2x64xf32>
    %350 = arith.addf %346, %349 : vector<2x64xf32>
    %351 = vector.extract_strided_slice %321 {offsets = [0, 7], sizes = [2, 1], strides = [1, 1]} : vector<2x8xf32> to vector<2x1xf32>
    %352 = vector.broadcast %351 : vector<2x1xf32> to vector<2x64xf32>
    %353 = arith.mulf %352, %304 : vector<2x64xf32>
    %354 = arith.addf %350, %353 : vector<2x64xf32>
    %355 = vector.extract_strided_slice %2 {offsets = [4, 0], sizes = [1, 64], strides = [1, 1]} : vector<8x256xf32> to vector<1x64xf32>
    %356 = vector.extract_strided_slice %2 {offsets = [5, 0], sizes = [1, 64], strides = [1, 1]} : vector<8x256xf32> to vector<1x64xf32>
    %357 = vector.extract_strided_slice %2 {offsets = [4, 64], sizes = [1, 1], strides = [1, 1]} : vector<8x256xf32> to vector<1x1xf32>
    %358 = vector.extract_strided_slice %2 {offsets = [5, 64], sizes = [1, 1], strides = [1, 1]} : vector<8x256xf32> to vector<1x1xf32>
    %359 = vector.broadcast %355 : vector<1x64xf32> to vector<2x64xf32>
    %360 = arith.mulf %354, %359 : vector<2x64xf32>
    %cst_33 = arith.constant dense<0.000000e+00> : vector<2xf32>
    %361 = vector.multi_reduction <add>, %360, %cst_33 [1] : vector<2x64xf32> to vector<2xf32>
    %362 = vector.shape_cast %361 : vector<2xf32> to vector<2x1xf32>
    %363 = vector.broadcast %357 : vector<1x1xf32> to vector<2x1xf32>
    %364 = arith.addf %362, %363 : vector<2x1xf32>
    %365 = vector.broadcast %356 : vector<1x64xf32> to vector<2x64xf32>
    %366 = arith.mulf %354, %365 : vector<2x64xf32>
    %cst_34 = arith.constant dense<0.000000e+00> : vector<2xf32>
    %367 = vector.multi_reduction <add>, %366, %cst_34 [1] : vector<2x64xf32> to vector<2xf32>
    %368 = vector.shape_cast %367 : vector<2xf32> to vector<2x1xf32>
    %369 = vector.broadcast %358 : vector<1x1xf32> to vector<2x1xf32>
    %370 = arith.addf %368, %369 : vector<2x1xf32>
    %371 = tpu.concatenate %364, %370 in 1 : vector<2x1xf32>, vector<2x1xf32> -> vector<2x2xf32>
    %c0_35 = arith.constant 0 : index
    %c0_36 = arith.constant 0 : index
    %372 = vector.load %arg4[%c0_35, %c0_36] : memref<2x2xf32, #tpu.memory_space<vmem>>, vector<2x2xf32>
    tpu.vector_store %arg4[%c0_35, %c0_36], %371 {strides = array<i32>} : memref<2x2xf32, #tpu.memory_space<vmem>>, vector<2x2xf32>,
    return
  }
  func.func @transform_0(%arg0: i32) -> (i32, i32) {
    %c0_i32 = arith.constant 0 : i32
    %c0_i32_0 = arith.constant 0 : i32
    %c0_i32_1 = arith.constant 0 : i32
    return %c0_i32, %c0_i32_0 : i32, i32
  }
  func.func @transform_1(%arg0: i32) -> (i32, i32) {
    %c0_i32 = arith.constant 0 : i32
    %c0_i32_0 = arith.constant 0 : i32
    %c0_i32_1 = arith.constant 0 : i32
    return %c0_i32, %c0_i32_0 : i32, i32
  }
  func.func @transform_2(%arg0: i32) -> (i32, i32) {
    %c0_i32 = arith.constant 0 : i32
    %c0_i32_0 = arith.constant 0 : i32
    %c0_i32_1 = arith.constant 0 : i32
    return %c0_i32, %c0_i32_0 : i32, i32
  }
  func.func @transform_3(%arg0: i32) -> (i32, i32) {
    %c0_i32 = arith.constant 0 : i32
    %c0_i32_0 = arith.constant 0 : i32
    %c0_i32_1 = arith.constant 0 : i32
    return %c0_i32, %c0_i32_0 : i32, i32
  }
}

</mosaic_0001>

<llo_original>
// kernel: stress_subtype_forward.1
$region0: #{stress_subtype_forward.1}
  #allocation0 [shape = 'u32[]', space=smem, size = 0x4, offset = 0x4, fixed_abs, tag = 'smem constant byte address 0x4 - core index']
  #allocation1 [shape = 'u32[144,128]{1,0:T(1,128)}', space=vmem, size = 0x12000, scoped, tag = 'internal scratch']
  %s0 = inlined_call_operand.vmem [shape: f32[2,8], index: 0, kind: input, shape index: {}]
  %s1 = inlined_call_operand.hbm [shape: bf16[64,256], index: 1, kind: input, shape index: {}]
  %s2 = inlined_call_operand.hbm [shape: f32[8,256], index: 2, kind: input, shape index: {}]
  %s3 = inlined_call_operand.hbm [shape: f32[2,2], index: 3, kind: output, shape index: {}]
  %s4 = sld [smem:[#allocation0]]
  $region30: #{stress_subtype_forward.1} parent=0
    _
  %s6 = ssub.s32 1, %s4
  %s7 = scalar_select 0, %s6, %s4
  $region1: #{stress_subtype_forward.1} parent=0
    #allocation2 [shape = 'u8[32768]{0}', space=vmem, size = 0x8000, scoped, tag = 'input window, operand 1, single buffered']
    #allocation3 [shape = 's32[1]{0}', space=sflag, size = 0x4, scoped, tag = 'scoped memory for stress_subtype_forward.1']
    #allocation4 [shape = 's32[1]{0}', space=sflag, size = 0x4, scoped, tag = 'scoped memory for stress_subtype_forward.1']
    #allocation5 [shape = 'u8[8192]{0}', space=vmem, size = 0x2000, scoped, tag = 'input window, operand 2, single buffered']
    #allocation6 [shape = 's32[1]{0}', space=sflag, size = 0x4, scoped, tag = 'scoped memory for stress_subtype_forward.1']
    #allocation7 [shape = 'u8[1024]{0}', space=vmem, size = 0x400, scoped, tag = 'output window, operand 0, single buffered']
    %8 = vsyncpa [#allocation3], 0
    %9 = vsyncpa [#allocation6], 0
    %10 = vsyncpa [#allocation4], 0
    // Predicated region
    $region2: #{stress_subtype_forward.1} parent=1 // pred_check
      _
    $region3: #{stress_subtype_forward.1} parent=1 // pred_check_branch
      %12 = sbr.rel (0) target = $region5
    $region4: #{stress_subtype_forward.1} parent=1 // pred_region
      _
    $region5: #{stress_subtype_forward.1} parent=1 // pred_fallthru
      _
    // Predicated region
    $region6: #{stress_subtype_forward.1} parent=1 // pred_check
      _
    $region7: #{stress_subtype_forward.1} parent=1 // pred_check_branch
      %14 = sbr.rel (0) target = $region9
    $region8: #{stress_subtype_forward.1} parent=1 // pred_region
      %s16 = ssub.s32 1024, 1024
      %17 = vsyncadd [#allocation3], %s16
      %s18 = sshll.u32 [#allocation2], 4
      %s19 = int_to_ptr.vmem [resolvable:$true] %s18
      %24 = dma.hbm_to_vmem [thread:$0]  %s1, 1024, %s19, [#allocation3], 128, 128, 8
    $region9: #{stress_subtype_forward.1} parent=1 // pred_fallthru
      _
    // Predicated region
    $region10: #{stress_subtype_forward.1} parent=1 // pred_check
      _
    $region11: #{stress_subtype_forward.1} parent=1 // pred_check_branch
      %26 = sbr.rel (0) target = $region13
    $region12: #{stress_subtype_forward.1} parent=1 // pred_region
      %s28 = ssub.s32 256, 256
      %29 = vsyncadd [#allocation6], %s28
      %s31 = sshll.u32 [#allocation5], 4
      %s32 = int_to_ptr.vmem [resolvable:$true] %s31
      %34 = dma.hbm_to_vmem [thread:$0]  %s2, 256, %s32, [#allocation6]
    $region13: #{stress_subtype_forward.1} parent=1 // pred_fallthru
      _
    // Predicated region
    $region14: #{stress_subtype_forward.1} parent=1 // pred_check
      _
    $region15: #{stress_subtype_forward.1} parent=1 // pred_check_branch
      %36 = sbr.rel (0) target = $region17
    $region16: #{stress_subtype_forward.1} parent=1 // pred_region
      %37 = dma.done [#allocation3], 1024
    $region17: #{stress_subtype_forward.1} parent=1 // pred_fallthru
      _
    // Predicated region
    $region18: #{stress_subtype_forward.1} parent=1 // pred_check
      _
    $region19: #{stress_subtype_forward.1} parent=1 // pred_check_branch
      %39 = sbr.rel (0) target = $region21
    $region20: #{stress_subtype_forward.1} parent=1 // pred_region
      %40 = dma.done [#allocation6], 256
    $region21: #{stress_subtype_forward.1} parent=1 // pred_fallthru
      _
    %v42 = vld [vmem:[%s0] sm:$0x3]
    %v43 = vld [vmem:[#allocation2] sm:$0xff]
    %v44 = vld [vmem:[#allocation2 + $0x8] sm:$0xff]
    %v45 = vld [vmem:[#allocation2 + $0x10] sm:$0xff]
    %v46 = vld [vmem:[#allocation2 + $0x18] sm:$0xff]
    %v47 = vld [vmem:[#allocation2 + $0x20] sm:$0xff]
    %v48 = vld [vmem:[#allocation2 + $0x28] sm:$0xff]
    %v49 = vld [vmem:[#allocation2 + $0x30] sm:$0xff]
    %v50 = vld [vmem:[#allocation2 + $0x38] sm:$0xff]
    %v51 = vld [vmem:[#allocation5] sm:$0xff]
    %v52 = vld [vmem:[#allocation5 + $0x8] sm:$0xff]
    %54 = vset.pattern.permute.xlu0 0
    %55 = vperm.xlu0 %54, %v42
    %v56 = vpop.permute.xlu0 %55
    %v58 = vlaneseq
    %v59 = vshrl.u32 %v58, 7
    %v60 = vsub.s32 0, %v59
    %v61 = vrot.slane %v51, %v60
    %v62 = vlaneseq
    %v63 = vshrl.u32 %v62, 7
    %v64 = vsub.s32 0, %v63
    %v65 = vrot.slane %v52, %v64
    %v66 = vmul.f32 %v56, %v61
    %v67 = vmul.f32 %v56, %v65
    %68 = vset.pattern.permute.xlu0 7
    %69 = vperm.xlu0 %68, %v42
    %v70 = vpop.permute.xlu0 %69
    %v72 = vlaneseq
    %v73 = vshrl.u32 %v72, 7
    %v74 = vsub.s32 1, %v73
    %v75 = vrot.slane %v51, %v74
    %v76 = vlaneseq
    %v77 = vshrl.u32 %v76, 7
    %v78 = vsub.s32 1, %v77
    %v79 = vrot.slane %v52, %v78
    %v80 = vmul.f32 %v70, %v75
    %v81 = vmul.f32 %v70, %v79
    %v82 = vadd.f32 %v66, %v80
    %v83 = vadd.f32 %v67, %v81
    %v84 = vlaneseq
    %v85 = vshrl.u32 %v84, 7
    %v86 = vsub.s32 2, %v85
    %v87 = vrot.slane %v51, %v86
    %v88 = vlaneseq
    %v89 = vshrl.u32 %v88, 7
    %v90 = vsub.s32 2, %v89
    %v91 = vrot.slane %v52, %v90
    %v92 = vadd.f32 %v82, %v87
    %v93 = vadd.f32 %v83, %v91
    %v102 = vunpack.c.l.b16 %v43
    %v103 = vunpack.c.h.b16 %v43
    %v104 = vunpack.c.l.b16 %v44
    %v105 = vunpack.c.h.b16 %v44
    %v106 = vunpack.c.l.b16 %v45
    %v107 = vunpack.c.h.b16 %v45
    %v108 = vunpack.c.l.b16 %v46
    %v109 = vunpack.c.h.b16 %v46
    %v110 = vunpack.c.l.b16 %v47
    %v111 = vunpack.c.h.b16 %v47
    %v112 = vunpack.c.l.b16 %v48
    %v113 = vunpack.c.h.b16 %v48
    %v114 = vunpack.c.l.b16 %v49
    %v115 = vunpack.c.h.b16 %v49
    %v116 = vunpack.c.l.b16 %v50
    %v117 = vunpack.c.h.b16 %v50
    %v118 = vpack.c.b16 %v104, %v102
    %v119 = vpack.c.b16 %v105, %v103
    %v120 = vpack.c.b16 %v108, %v106
    %v121 = vpack.c.b16 %v109, %v107
    %v122 = vpack.c.b16 %v112, %v110
    %v123 = vpack.c.b16 %v113, %v111
    %v124 = vpack.c.b16 %v116, %v114
    %v125 = vpack.c.b16 %v117, %v115
    %vm134 = vcmask 523264
    %v136 = vsel %vm134, 0, 0
    %138 = vmatprep.subr.bf16.mxu0 %v119
    %139 = vmatpush1.bf16.msra.mxu0 %v118
    %140 = vmatprep.subr.bf16.mxu0 %v121
    %141 = vmatpush1.bf16.msra.mxu0 %v120
    %142 = vmatprep.subr.bf16.mxu0 %v123
    %143 = vmatpush1.bf16.msra.mxu0 %v122
    %144 = vmatprep.subr.bf16.mxu0 %v125
    %145 = vmatpush1.bf16.msra.mxu0 %v124
    %146 = vmatprep.subr.bf16.mxu0 0
    %147 = vmatpush1.bf16.msra.mxu0 0
    %148 = vmatprep.subr.bf16.mxu0 0
    %149 = vmatpush1.bf16.msra.mxu0 0
    %150 = vmatprep.subr.bf16.mxu0 0
    %151 = vmatpush1.bf16.msra.mxu0 0
    %152 = vmatprep.subr.bf16.mxu0 0
    %153 = vmatpush1.bf16.msra.mxu0 0
    %154 = vmatprep.subr.bf16.mxu0 0
    %155 = vmatpush1.bf16.msra.mxu0 0
    %156 = vmatprep.subr.bf16.mxu0 0
    %157 = vmatpush1.bf16.msra.mxu0 0
    %158 = vmatprep.subr.bf16.mxu0 0
    %159 = vmatpush1.bf16.msra.mxu0 0
    %160 = vmatprep.subr.bf16.mxu0 0
    %161 = vmatpush1.bf16.msra.mxu0 0
    %162 = vmatprep.subr.bf16.mxu0 0
    %163 = vmatpush1.bf16.msra.mxu0 0
    %164 = vmatprep.subr.bf16.mxu0 0
    %165 = vmatpush1.bf16.msra.mxu0 0
    %166 = vmatprep.subr.bf16.mxu0 0
    %167 = vmatpush1.bf16.msra.mxu0 0
    %168 = vmatprep.subr.bf16.mxu0 0
    %169 = vmatpush1.bf16.msra.mxu0 0
    %170 = vmatprep.mubr.bf16.mxu0 0
    %171 = vmatmul.mubr.bf16.gmra.mrb[0].mxu0 %v136
    %v172 = vpop.f32.mrb[0].mxu0
    %v173 = vadd.f32 0.0, %v172
    %v174 = vpop.f32.mrb[0].mxu0
    %v175 = vadd.f32 0.0, %v174
    %v176 = vpop.f32.mrb[0].mxu0
    %v177 = vpop.f32.mrb[0].mxu0
    %178 = vdwg.mxu0
    %v179 = vadd.f32 %v92, %v173
    %v180 = vadd.f32 %v93, %v175
    %v181 = vxor.u32 %v179, 2147483648
    %v182 = vxor.u32 %v180, 2147483648
    %v183 = vmul.f32 %v181, 1.442695
    %v184 = vpow.pop %v183
    %v185 = vmul.f32 %v182, 1.442695
    %v186 = vpow.pop %v185
    %v187 = vadd.f32 %v184, 1.0
    %v188 = vadd.f32 %v186, 1.0
    %v189 = vrcp.pop %v187
    %v190 = vmul.f32 1.0, %v189
    %v191 = vrcp.pop %v188
    %v192 = vmul.f32 1.0, %v191
    %v193 = vtanh.pop %v180
    %v194 = vmul.f32 %v190, 0.0
    %v195 = vmul.f32 %v190, %v193
    %197 = vrot.lane.b32.xlu0 %v195, 64
    %v198 = vpop.permute.xlu0 %197
    %v200 = vadd.f32 %v194, %v198
    %v201 = vtanh.pop %v200
    %v202 = vmul.f32 %v192, %v201
    %203 = vset.pattern.permute.xlu0 1
    %204 = vperm.xlu0 %203, %v42
    %v205 = vpop.permute.xlu0 %204
    %v207 = vmul.f32 %v205, %v61
    %v208 = vmul.f32 %v205, %v65
    %209 = vset.pattern.permute.xlu0 6
    %210 = vperm.xlu0 %209, %v42
    %v211 = vpop.permute.xlu0 %210
    %v213 = vmul.f32 %v211, %v75
    %v214 = vmul.f32 %v211, %v79
    %v215 = vadd.f32 %v207, %v213
    %v216 = vadd.f32 %v208, %v214
    %v217 = vadd.f32 %v215, %v87
    %v218 = vadd.f32 %v216, %v91
    %v219 = vpack.c.bf16 %v202, %v202
    %v221 = vsel %vm134, %v219, 0
    %223 = vmatprep.subr.bf16.mxu0 %v119
    %224 = vmatpush1.bf16.msra.mxu0 %v118
    %225 = vmatprep.subr.bf16.mxu0 %v121
    %226 = vmatpush1.bf16.msra.mxu0 %v120
    %227 = vmatprep.subr.bf16.mxu0 %v123
    %228 = vmatpush1.bf16.msra.mxu0 %v122
    %229 = vmatprep.subr.bf16.mxu0 %v125
    %230 = vmatpush1.bf16.msra.mxu0 %v124
    %231 = vmatprep.subr.bf16.mxu0 0
    %232 = vmatpush1.bf16.msra.mxu0 0
    %233 = vmatprep.subr.bf16.mxu0 0
    %234 = vmatpush1.bf16.msra.mxu0 0
    %235 = vmatprep.subr.bf16.mxu0 0
    %236 = vmatpush1.bf16.msra.mxu0 0
    %237 = vmatprep.subr.bf16.mxu0 0
    %238 = vmatpush1.bf16.msra.mxu0 0
    %239 = vmatprep.subr.bf16.mxu0 0
    %240 = vmatpush1.bf16.msra.mxu0 0
    %241 = vmatprep.subr.bf16.mxu0 0
    %242 = vmatpush1.bf16.msra.mxu0 0
    %243 = vmatprep.subr.bf16.mxu0 0
    %244 = vmatpush1.bf16.msra.mxu0 0
    %245 = vmatprep.subr.bf16.mxu0 0
    %246 = vmatpush1.bf16.msra.mxu0 0
    %247 = vmatprep.subr.bf16.mxu0 0
    %248 = vmatpush1.bf16.msra.mxu0 0
    %249 = vmatprep.subr.bf16.mxu0 0
    %250 = vmatpush1.bf16.msra.mxu0 0
    %251 = vmatprep.subr.bf16.mxu0 0
    %252 = vmatpush1.bf16.msra.mxu0 0
    %253 = vmatprep.subr.bf16.mxu0 0
    %254 = vmatpush1.bf16.msra.mxu0 0
    %255 = vmatprep.mubr.bf16.mxu0 0
    %256 = vmatmul.mubr.bf16.gmra.mrb[0].mxu0 %v221
    %v257 = vpop.f32.mrb[0].mxu0
    %v258 = vadd.f32 0.0, %v257
    %v259 = vpop.f32.mrb[0].mxu0
    %v260 = vadd.f32 0.0, %v259
    %v261 = vpop.f32.mrb[0].mxu0
    %v262 = vpop.f32.mrb[0].mxu0
    %263 = vdwg.mxu0
    %v264 = vadd.f32 %v217, %v258
    %v265 = vadd.f32 %v218, %v260
    %v266 = vxor.u32 %v264, 2147483648
    %v267 = vxor.u32 %v265, 2147483648
    %v268 = vmul.f32 %v266, 1.442695
    %v269 = vpow.pop %v268
    %v270 = vmul.f32 %v267, 1.442695
    %v271 = vpow.pop %v270
    %v272 = vadd.f32 %v269, 1.0
    %v273 = vadd.f32 %v271, 1.0
    %v274 = vrcp.pop %v272
    %v275 = vmul.f32 1.0, %v274
    %v276 = vrcp.pop %v273
    %v277 = vmul.f32 1.0, %v276
    %v278 = vtanh.pop %v265
    %v279 = vmul.f32 %v275, %v200
    %v280 = vmul.f32 %v275, %v278
    %282 = vrot.lane.b32.xlu0 %v280, 64
    %v283 = vpop.permute.xlu0 %282
    %v285 = vadd.f32 %v279, %v283
    %v286 = vtanh.pop %v285
    %v287 = vmul.f32 %v277, %v286
    %288 = vset.pattern.permute.xlu0 2
    %289 = vperm.xlu0 %288, %v42
    %v290 = vpop.permute.xlu0 %289
    %v292 = vmul.f32 %v290, %v61
    %v293 = vmul.f32 %v290, %v65
    %294 = vset.pattern.permute.xlu0 5
    %295 = vperm.xlu0 %294, %v42
    %v296 = vpop.permute.xlu0 %295
    %v298 = vmul.f32 %v296, %v75
    %v299 = vmul.f32 %v296, %v79
    %v300 = vadd.f32 %v292, %v298
    %v301 = vadd.f32 %v293, %v299
    %v302 = vadd.f32 %v300, %v87
    %v303 = vadd.f32 %v301, %v91
    %v304 = vpack.c.bf16 %v287, %v287
    %v306 = vsel %vm134, %v304, 0
    %308 = vmatprep.subr.bf16.mxu0 %v119
    %309 = vmatpush1.bf16.msra.mxu0 %v118
    %310 = vmatprep.subr.bf16.mxu0 %v121
    %311 = vmatpush1.bf16.msra.mxu0 %v120
    %312 = vmatprep.subr.bf16.mxu0 %v123
    %313 = vmatpush1.bf16.msra.mxu0 %v122
    %314 = vmatprep.subr.bf16.mxu0 %v125
    %315 = vmatpush1.bf16.msra.mxu0 %v124
    %316 = vmatprep.subr.bf16.mxu0 0
    %317 = vmatpush1.bf16.msra.mxu0 0
    %318 = vmatprep.subr.bf16.mxu0 0
    %319 = vmatpush1.bf16.msra.mxu0 0
    %320 = vmatprep.subr.bf16.mxu0 0
    %321 = vmatpush1.bf16.msra.mxu0 0
    %322 = vmatprep.subr.bf16.mxu0 0
    %323 = vmatpush1.bf16.msra.mxu0 0
    %324 = vmatprep.subr.bf16.mxu0 0
    %325 = vmatpush1.bf16.msra.mxu0 0
    %326 = vmatprep.subr.bf16.mxu0 0
    %327 = vmatpush1.bf16.msra.mxu0 0
    %328 = vmatprep.subr.bf16.mxu0 0
    %329 = vmatpush1.bf16.msra.mxu0 0
    %330 = vmatprep.subr.bf16.mxu0 0
    %331 = vmatpush1.bf16.msra.mxu0 0
    %332 = vmatprep.subr.bf16.mxu0 0
    %333 = vmatpush1.bf16.msra.mxu0 0
    %334 = vmatprep.subr.bf16.mxu0 0
    %335 = vmatpush1.bf16.msra.mxu0 0
    %336 = vmatprep.subr.bf16.mxu0 0
    %337 = vmatpush1.bf16.msra.mxu0 0
    %338 = vmatprep.subr.bf16.mxu0 0
    %339 = vmatpush1.bf16.msra.mxu0 0
    %340 = vmatprep.mubr.bf16.mxu0 0
    %341 = vmatmul.mubr.bf16.gmra.mrb[0].mxu0 %v306
    %v342 = vpop.f32.mrb[0].mxu0
    %v343 = vadd.f32 0.0, %v342
    %v344 = vpop.f32.mrb[0].mxu0
    %v345 = vadd.f32 0.0, %v344
    %v346 = vpop.f32.mrb[0].mxu0
    %v347 = vpop.f32.mrb[0].mxu0
    %348 = vdwg.mxu0
    %v349 = vadd.f32 %v302, %v343
    %v350 = vadd.f32 %v303, %v345
    %v351 = vxor.u32 %v349, 2147483648
    %v352 = vxor.u32 %v350, 2147483648
    %v353 = vmul.f32 %v351, 1.442695
    %v354 = vpow.pop %v353
    %v355 = vmul.f32 %v352, 1.442695
    %v356 = vpow.pop %v355
    %v357 = vadd.f32 %v354, 1.0
    %v358 = vadd.f32 %v356, 1.0
    %v359 = vrcp.pop %v357
    %v360 = vmul.f32 1.0, %v359
    %v361 = vrcp.pop %v358
    %v362 = vmul.f32 1.0, %v361
    %v363 = vtanh.pop %v350
    %v364 = vmul.f32 %v360, %v285
    %v365 = vmul.f32 %v360, %v363
    %367 = vrot.lane.b32.xlu0 %v365, 64
    %v368 = vpop.permute.xlu0 %367
    %v370 = vadd.f32 %v364, %v368
    %v371 = vtanh.pop %v370
    %v372 = vmul.f32 %v362, %v371
    %373 = vset.pattern.permute.xlu0 3
    %374 = vperm.xlu0 %373, %v42
    %v375 = vpop.permute.xlu0 %374
    %v377 = vmul.f32 %v375, %v61
    %v378 = vmul.f32 %v375, %v65
    %379 = vset.pattern.permute.xlu0 4
    %380 = vperm.xlu0 %379, %v42
    %v381 = vpop.permute.xlu0 %380
    %v383 = vmul.f32 %v381, %v75
    %v384 = vmul.f32 %v381, %v79
    %v385 = vadd.f32 %v377, %v383
    %v386 = vadd.f32 %v378, %v384
    %v387 = vadd.f32 %v385, %v87
    %v388 = vadd.f32 %v386, %v91
    %v389 = vpack.c.bf16 %v372, %v372
    %v391 = vsel %vm134, %v389, 0
    %393 = vmatprep.subr.bf16.mxu0 %v119
    %394 = vmatpush1.bf16.msra.mxu0 %v118
    %395 = vmatprep.subr.bf16.mxu0 %v121
    %396 = vmatpush1.bf16.msra.mxu0 %v120
    %397 = vmatprep.subr.bf16.mxu0 %v123
    %398 = vmatpush1.bf16.msra.mxu0 %v122
    %399 = vmatprep.subr.bf16.mxu0 %v125
    %400 = vmatpush1.bf16.msra.mxu0 %v124
    %401 = vmatprep.subr.bf16.mxu0 0
    %402 = vmatpush1.bf16.msra.mxu0 0
    %403 = vmatprep.subr.bf16.mxu0 0
    %404 = vmatpush1.bf16.msra.mxu0 0
    %405 = vmatprep.subr.bf16.mxu0 0
    %406 = vmatpush1.bf16.msra.mxu0 0
    %407 = vmatprep.subr.bf16.mxu0 0
    %408 = vmatpush1.bf16.msra.mxu0 0
    %409 = vmatprep.subr.bf16.mxu0 0
    %410 = vmatpush1.bf16.msra.mxu0 0
    %411 = vmatprep.subr.bf16.mxu0 0
    %412 = vmatpush1.bf16.msra.mxu0 0
    %413 = vmatprep.subr.bf16.mxu0 0
    %414 = vmatpush1.bf16.msra.mxu0 0
    %415 = vmatprep.subr.bf16.mxu0 0
    %416 = vmatpush1.bf16.msra.mxu0 0
    %417 = vmatprep.subr.bf16.mxu0 0
    %418 = vmatpush1.bf16.msra.mxu0 0
    %419 = vmatprep.subr.bf16.mxu0 0
    %420 = vmatpush1.bf16.msra.mxu0 0
    %421 = vmatprep.subr.bf16.mxu0 0
    %422 = vmatpush1.bf16.msra.mxu0 0
    %423 = vmatprep.subr.bf16.mxu0 0
    %424 = vmatpush1.bf16.msra.mxu0 0
    %425 = vmatprep.mubr.bf16.mxu0 0
    %426 = vmatmul.mubr.bf16.gmra.mrb[0].mxu0 %v391
    %v427 = vpop.f32.mrb[0].mxu0
    %v428 = vadd.f32 0.0, %v427
    %v429 = vpop.f32.mrb[0].mxu0
    %v430 = vadd.f32 0.0, %v429
    %v431 = vpop.f32.mrb[0].mxu0
    %v432 = vpop.f32.mrb[0].mxu0
    %433 = vdwg.mxu0
    %v434 = vadd.f32 %v387, %v428
    %v435 = vadd.f32 %v388, %v430
    %v436 = vxor.u32 %v434, 2147483648
    %v437 = vxor.u32 %v435, 2147483648
    %v438 = vmul.f32 %v436, 1.442695
    %v439 = vpow.pop %v438
    %v440 = vmul.f32 %v437, 1.442695
    %v441 = vpow.pop %v440
    %v442 = vadd.f32 %v439, 1.0
    %v443 = vadd.f32 %v441, 1.0
    %v444 = vrcp.pop %v442
    %v445 = vmul.f32 1.0, %v444
    %v446 = vrcp.pop %v443
    %v447 = vmul.f32 1.0, %v446
    %v448 = vtanh.pop %v435
    %v449 = vmul.f32 %v445, %v370
    %v450 = vmul.f32 %v445, %v448
    %452 = vrot.lane.b32.xlu0 %v450, 64
    %v453 = vpop.permute.xlu0 %452
    %v455 = vadd.f32 %v449, %v453
    %v456 = vtanh.pop %v455
    %v457 = vmul.f32 %v447, %v456
    %v458 = vmul.f32 %v381, %v61
    %v459 = vmul.f32 %v381, %v65
    %v460 = vmul.f32 %v375, %v75
    %v461 = vmul.f32 %v375, %v79
    %v462 = vadd.f32 %v458, %v460
    %v463 = vadd.f32 %v459, %v461
    %v464 = vadd.f32 %v462, %v87
    %v465 = vadd.f32 %v463, %v91
    %v466 = vpack.c.bf16 %v457, %v457
    %v468 = vsel %vm134, %v466, 0
    %470 = vmatprep.subr.bf16.mxu0 %v119
    %471 = vmatpush1.bf16.msra.mxu0 %v118
    %472 = vmatprep.subr.bf16.mxu0 %v121
    %473 = vmatpush1.bf16.msra.mxu0 %v120
    %474 = vmatprep.subr.bf16.mxu0 %v123
    %475 = vmatpush1.bf16.msra.mxu0 %v122
    %476 = vmatprep.subr.bf16.mxu0 %v125
    %477 = vmatpush1.bf16.msra.mxu0 %v124
    %478 = vmatprep.subr.bf16.mxu0 0
    %479 = vmatpush1.bf16.msra.mxu0 0
    %480 = vmatprep.subr.bf16.mxu0 0
    %481 = vmatpush1.bf16.msra.mxu0 0
    %482 = vmatprep.subr.bf16.mxu0 0
    %483 = vmatpush1.bf16.msra.mxu0 0
    %484 = vmatprep.subr.bf16.mxu0 0
    %485 = vmatpush1.bf16.msra.mxu0 0
    %486 = vmatprep.subr.bf16.mxu0 0
    %487 = vmatpush1.bf16.msra.mxu0 0
    %488 = vmatprep.subr.bf16.mxu0 0
    %489 = vmatpush1.bf16.msra.mxu0 0
    %490 = vmatprep.subr.bf16.mxu0 0
    %491 = vmatpush1.bf16.msra.mxu0 0
    %492 = vmatprep.subr.bf16.mxu0 0
    %493 = vmatpush1.bf16.msra.mxu0 0
    %494 = vmatprep.subr.bf16.mxu0 0
    %495 = vmatpush1.bf16.msra.mxu0 0
    %496 = vmatprep.subr.bf16.mxu0 0
    %497 = vmatpush1.bf16.msra.mxu0 0
    %498 = vmatprep.subr.bf16.mxu0 0
    %499 = vmatpush1.bf16.msra.mxu0 0
    %500 = vmatprep.subr.bf16.mxu0 0
    %501 = vmatpush1.bf16.msra.mxu0 0
    %502 = vmatprep.mubr.bf16.mxu0 0
    %503 = vmatmul.mubr.bf16.gmra.mrb[0].mxu0 %v468
    %v504 = vpop.f32.mrb[0].mxu0
    %v505 = vadd.f32 0.0, %v504
    %v506 = vpop.f32.mrb[0].mxu0
    %v507 = vadd.f32 0.0, %v506
    %v508 = vpop.f32.mrb[0].mxu0
    %v509 = vpop.f32.mrb[0].mxu0
    %510 = vdwg.mxu0
    %v511 = vadd.f32 %v464, %v505
    %v512 = vadd.f32 %v465, %v507
    %v513 = vxor.u32 %v511, 2147483648
    %v514 = vxor.u32 %v512, 2147483648
    %v515 = vmul.f32 %v513, 1.442695
    %v516 = vpow.pop %v515
    %v517 = vmul.f32 %v514, 1.442695
    %v518 = vpow.pop %v517
    %v519 = vadd.f32 %v516, 1.0
    %v520 = vadd.f32 %v518, 1.0
    %v521 = vrcp.pop %v519
    %v522 = vmul.f32 1.0, %v521
    %v523 = vrcp.pop %v520
    %v524 = vmul.f32 1.0, %v523
    %v525 = vtanh.pop %v512
    %v526 = vmul.f32 %v522, %v455
    %v527 = vmul.f32 %v522, %v525
    %529 = vrot.lane.b32.xlu0 %v527, 64
    %v530 = vpop.permute.xlu0 %529
    %v532 = vadd.f32 %v526, %v530
    %v533 = vtanh.pop %v532
    %v534 = vmul.f32 %v524, %v533
    %v535 = vmul.f32 %v296, %v61
    %v536 = vmul.f32 %v296, %v65
    %v537 = vmul.f32 %v290, %v75
    %v538 = vmul.f32 %v290, %v79
    %v539 = vadd.f32 %v535, %v537
    %v540 = vadd.f32 %v536, %v538
    %v541 = vadd.f32 %v539, %v87
    %v542 = vadd.f32 %v540, %v91
    %v543 = vpack.c.bf16 %v534, %v534
    %v545 = vsel %vm134, %v543, 0
    %547 = vmatprep.subr.bf16.mxu0 %v119
    %548 = vmatpush1.bf16.msra.mxu0 %v118
    %549 = vmatprep.subr.bf16.mxu0 %v121
    %550 = vmatpush1.bf16.msra.mxu0 %v120
    %551 = vmatprep.subr.bf16.mxu0 %v123
    %552 = vmatpush1.bf16.msra.mxu0 %v122
    %553 = vmatprep.subr.bf16.mxu0 %v125
    %554 = vmatpush1.bf16.msra.mxu0 %v124
    %555 = vmatprep.subr.bf16.mxu0 0
    %556 = vmatpush1.bf16.msra.mxu0 0
    %557 = vmatprep.subr.bf16.mxu0 0
    %558 = vmatpush1.bf16.msra.mxu0 0
    %559 = vmatprep.subr.bf16.mxu0 0
    %560 = vmatpush1.bf16.msra.mxu0 0
    %561 = vmatprep.subr.bf16.mxu0 0
    %562 = vmatpush1.bf16.msra.mxu0 0
    %563 = vmatprep.subr.bf16.mxu0 0
    %564 = vmatpush1.bf16.msra.mxu0 0
    %565 = vmatprep.subr.bf16.mxu0 0
    %566 = vmatpush1.bf16.msra.mxu0 0
    %567 = vmatprep.subr.bf16.mxu0 0
    %568 = vmatpush1.bf16.msra.mxu0 0
    %569 = vmatprep.subr.bf16.mxu0 0
    %570 = vmatpush1.bf16.msra.mxu0 0
    %571 = vmatprep.subr.bf16.mxu0 0
    %572 = vmatpush1.bf16.msra.mxu0 0
    %573 = vmatprep.subr.bf16.mxu0 0
    %574 = vmatpush1.bf16.msra.mxu0 0
    %575 = vmatprep.subr.bf16.mxu0 0
    %576 = vmatpush1.bf16.msra.mxu0 0
    %577 = vmatprep.subr.bf16.mxu0 0
    %578 = vmatpush1.bf16.msra.mxu0 0
    %579 = vmatprep.mubr.bf16.mxu0 0
    %580 = vmatmul.mubr.bf16.gmra.mrb[0].mxu0 %v545
    %v581 = vpop.f32.mrb[0].mxu0
    %v582 = vadd.f32 0.0, %v581
    %v583 = vpop.f32.mrb[0].mxu0
    %v584 = vadd.f32 0.0, %v583
    %v585 = vpop.f32.mrb[0].mxu0
    %v586 = vpop.f32.mrb[0].mxu0
    %587 = vdwg.mxu0
    %v588 = vadd.f32 %v541, %v582
    %v589 = vadd.f32 %v542, %v584
    %v590 = vxor.u32 %v588, 2147483648
    %v591 = vxor.u32 %v589, 2147483648
    %v592 = vmul.f32 %v590, 1.442695
    %v593 = vpow.pop %v592
    %v594 = vmul.f32 %v591, 1.442695
    %v595 = vpow.pop %v594
    %v596 = vadd.f32 %v593, 1.0
    %v597 = vadd.f32 %v595, 1.0
    %v598 = vrcp.pop %v596
    %v599 = vmul.f32 1.0, %v598
    %v600 = vrcp.pop %v597
    %v601 = vmul.f32 1.0, %v600
    %v602 = vtanh.pop %v589
    %v603 = vmul.f32 %v599, %v532
    %v604 = vmul.f32 %v599, %v602
    %606 = vrot.lane.b32.xlu0 %v604, 64
    %v607 = vpop.permute.xlu0 %606
    %v609 = vadd.f32 %v603, %v607
    %v610 = vtanh.pop %v609
    %v611 = vmul.f32 %v601, %v610
    %v612 = vmul.f32 %v211, %v61
    %v613 = vmul.f32 %v211, %v65
    %v614 = vmul.f32 %v205, %v75
    %v615 = vmul.f32 %v205, %v79
    %v616 = vadd.f32 %v612, %v614
    %v617 = vadd.f32 %v613, %v615
    %v618 = vadd.f32 %v616, %v87
    %v619 = vadd.f32 %v617, %v91
    %v620 = vpack.c.bf16 %v611, %v611
    %v622 = vsel %vm134, %v620, 0
    %624 = vmatprep.subr.bf16.mxu0 %v119
    %625 = vmatpush1.bf16.msra.mxu0 %v118
    %626 = vmatprep.subr.bf16.mxu0 %v121
    %627 = vmatpush1.bf16.msra.mxu0 %v120
    %628 = vmatprep.subr.bf16.mxu0 %v123
    %629 = vmatpush1.bf16.msra.mxu0 %v122
    %630 = vmatprep.subr.bf16.mxu0 %v125
    %631 = vmatpush1.bf16.msra.mxu0 %v124
    %632 = vmatprep.subr.bf16.mxu0 0
    %633 = vmatpush1.bf16.msra.mxu0 0
    %634 = vmatprep.subr.bf16.mxu0 0
    %635 = vmatpush1.bf16.msra.mxu0 0
    %636 = vmatprep.subr.bf16.mxu0 0
    %637 = vmatpush1.bf16.msra.mxu0 0
    %638 = vmatprep.subr.bf16.mxu0 0
    %639 = vmatpush1.bf16.msra.mxu0 0
    %640 = vmatprep.subr.bf16.mxu0 0
    %641 = vmatpush1.bf16.msra.mxu0 0
    %642 = vmatprep.subr.bf16.mxu0 0
    %643 = vmatpush1.bf16.msra.mxu0 0
    %644 = vmatprep.subr.bf16.mxu0 0
    %645 = vmatpush1.bf16.msra.mxu0 0
    %646 = vmatprep.subr.bf16.mxu0 0
    %647 = vmatpush1.bf16.msra.mxu0 0
    %648 = vmatprep.subr.bf16.mxu0 0
    %649 = vmatpush1.bf16.msra.mxu0 0
    %650 = vmatprep.subr.bf16.mxu0 0
    %651 = vmatpush1.bf16.msra.mxu0 0
    %652 = vmatprep.subr.bf16.mxu0 0
    %653 = vmatpush1.bf16.msra.mxu0 0
    %654 = vmatprep.subr.bf16.mxu0 0
    %655 = vmatpush1.bf16.msra.mxu0 0
    %656 = vmatprep.mubr.bf16.mxu0 0
    %657 = vmatmul.mubr.bf16.gmra.mrb[0].mxu0 %v622
    %v658 = vpop.f32.mrb[0].mxu0
    %v659 = vadd.f32 0.0, %v658
    %v660 = vpop.f32.mrb[0].mxu0
    %v661 = vadd.f32 0.0, %v660
    %v662 = vpop.f32.mrb[0].mxu0
    %v663 = vpop.f32.mrb[0].mxu0
    %664 = vdwg.mxu0
    %v665 = vadd.f32 %v618, %v659
    %v666 = vadd.f32 %v619, %v661
    %v667 = vxor.u32 %v665, 2147483648
    %v668 = vxor.u32 %v666, 2147483648
    %v669 = vmul.f32 %v667, 1.442695
    %v670 = vpow.pop %v669
    %v671 = vmul.f32 %v668, 1.442695
    %v672 = vpow.pop %v671
    %v673 = vadd.f32 %v670, 1.0
    %v674 = vadd.f32 %v672, 1.0
    %v675 = vrcp.pop %v673
    %v676 = vmul.f32 1.0, %v675
    %v677 = vrcp.pop %v674
    %v678 = vmul.f32 1.0, %v677
    %v679 = vtanh.pop %v666
    %v680 = vmul.f32 %v676, %v609
    %v681 = vmul.f32 %v676, %v679
    %683 = vrot.lane.b32.xlu0 %v681, 64
    %v684 = vpop.permute.xlu0 %683
    %v686 = vadd.f32 %v680, %v684
    %v687 = vtanh.pop %v686
    %v688 = vmul.f32 %v678, %v687
    %v689 = vmul.f32 %v70, %v61
    %v690 = vmul.f32 %v70, %v65
    %v691 = vmul.f32 %v56, %v75
    %v692 = vmul.f32 %v56, %v79
    %v693 = vadd.f32 %v689, %v691
    %v694 = vadd.f32 %v690, %v692
    %v695 = vadd.f32 %v693, %v87
    %v696 = vadd.f32 %v694, %v91
    %v697 = vpack.c.bf16 %v688, %v688
    %v699 = vsel %vm134, %v697, 0
    %701 = vmatprep.subr.bf16.mxu0 %v119
    %702 = vmatpush1.bf16.msra.mxu0 %v118
    %703 = vmatprep.subr.bf16.mxu0 %v121
    %704 = vmatpush1.bf16.msra.mxu0 %v120
    %705 = vmatprep.subr.bf16.mxu0 %v123
    %706 = vmatpush1.bf16.msra.mxu0 %v122
    %707 = vmatprep.subr.bf16.mxu0 %v125
    %708 = vmatpush1.bf16.msra.mxu0 %v124
    %709 = vmatprep.subr.bf16.mxu0 0
    %710 = vmatpush1.bf16.msra.mxu0 0
    %711 = vmatprep.subr.bf16.mxu0 0
    %712 = vmatpush1.bf16.msra.mxu0 0
    %713 = vmatprep.subr.bf16.mxu0 0
    %714 = vmatpush1.bf16.msra.mxu0 0
    %715 = vmatprep.subr.bf16.mxu0 0
    %716 = vmatpush1.bf16.msra.mxu0 0
    %717 = vmatprep.subr.bf16.mxu0 0
    %718 = vmatpush1.bf16.msra.mxu0 0
    %719 = vmatprep.subr.bf16.mxu0 0
    %720 = vmatpush1.bf16.msra.mxu0 0
    %721 = vmatprep.subr.bf16.mxu0 0
    %722 = vmatpush1.bf16.msra.mxu0 0
    %723 = vmatprep.subr.bf16.mxu0 0
    %724 = vmatpush1.bf16.msra.mxu0 0
    %725 = vmatprep.subr.bf16.mxu0 0
    %726 = vmatpush1.bf16.msra.mxu0 0
    %727 = vmatprep.subr.bf16.mxu0 0
    %728 = vmatpush1.bf16.msra.mxu0 0
    %729 = vmatprep.subr.bf16.mxu0 0
    %730 = vmatpush1.bf16.msra.mxu0 0
    %731 = vmatprep.subr.bf16.mxu0 0
    %732 = vmatpush1.bf16.msra.mxu0 0
    %733 = vmatprep.mubr.bf16.mxu0 0
    %734 = vmatmul.mubr.bf16.gmra.mrb[0].mxu0 %v699
    %v735 = vpop.f32.mrb[0].mxu0
    %v736 = vadd.f32 0.0, %v735
    %v737 = vpop.f32.mrb[0].mxu0
    %v738 = vadd.f32 0.0, %v737
    %v739 = vpop.f32.mrb[0].mxu0
    %v740 = vpop.f32.mrb[0].mxu0
    %741 = vdwg.mxu0
    %v742 = vadd.f32 %v695, %v736
    %v743 = vadd.f32 %v696, %v738
    %v744 = vxor.u32 %v742, 2147483648
    %v745 = vxor.u32 %v743, 2147483648
    %v746 = vmul.f32 %v744, 1.442695
    %v747 = vpow.pop %v746
    %v748 = vmul.f32 %v745, 1.442695
    %v749 = vpow.pop %v748
    %v750 = vadd.f32 %v747, 1.0
    %v751 = vadd.f32 %v749, 1.0
    %v752 = vrcp.pop %v750
    %v753 = vmul.f32 1.0, %v752
    %v754 = vrcp.pop %v751
    %v755 = vmul.f32 1.0, %v754
    %v756 = vtanh.pop %v743
    %v757 = vmul.f32 %v753, %v686
    %v758 = vmul.f32 %v753, %v756
    %760 = vrot.lane.b32.xlu0 %v758, 64
    %v761 = vpop.permute.xlu0 %760
    %v763 = vadd.f32 %v757, %v761
    %v764 = vtanh.pop %v763
    %v765 = vmul.f32 %v755, %v764
    %v766 = vlaneseq
    %v767 = vand.u32 %v766, 127
    %vm768 = vcmp.lt.s32.totalorder %v767, 32
    %v769 = vsel %vm768, 1, 0
    %vm770 = vcmp.eq.s32.totalorder %v769, 1
    %v771 = vsel %vm770, %v202, %v765
    %v772 = vlaneseq
    %v773 = vshrl.u32 %v772, 7
    %v774 = vsub.s32 3, %v773
    %v775 = vrot.slane %v51, %v774
    %v776 = vmul.f32 %v771, %v775
    %vm777 = vcmask 517120
    %v778 = vsel %vm777, %v776, 0.0
    %779 = vadd.xlane.f32.xlu0 %v778
    %v780 = vpop.xlane.xlu0 %779
    %v781 = vsel %vm770, %v287, %v688
    %v782 = vmul.f32 %v781, %v775
    %v783 = vsel %vm777, %v782, 0.0
    %784 = vadd.xlane.f32.xlu0 %v783
    %v785 = vpop.xlane.xlu0 %784
    %v786 = vsel %vm770, %v372, %v611
    %v787 = vmul.f32 %v786, %v775
    %v788 = vsel %vm777, %v787, 0.0
    %789 = vadd.xlane.f32.xlu0 %v788
    %v790 = vpop.xlane.xlu0 %789
    %v791 = vsel %vm770, %v457, %v534
    %v792 = vmul.f32 %v791, %v775
    %v793 = vsel %vm777, %v792, 0.0
    %794 = vadd.xlane.f32.xlu0 %v793
    %v795 = vpop.xlane.xlu0 %794
    %v796 = vsel %vm770, %v534, %v457
    %v797 = vmul.f32 %v796, %v775
    %v798 = vsel %vm777, %v797, 0.0
    %799 = vadd.xlane.f32.xlu0 %v798
    %v800 = vpop.xlane.xlu0 %799
    %v801 = vsel %vm770, %v611, %v372
    %v802 = vmul.f32 %v801, %v775
    %v803 = vsel %vm777, %v802, 0.0
    %804 = vadd.xlane.f32.xlu0 %v803
    %v805 = vpop.xlane.xlu0 %804
    %v806 = vsel %vm770, %v688, %v287
    %v807 = vmul.f32 %v806, %v775
    %v808 = vsel %vm777, %v807, 0.0
    %809 = vadd.xlane.f32.xlu0 %v808
    %v810 = vpop.xlane.xlu0 %809
    %v811 = vsel %vm770, %v765, %v202
    %v812 = vmul.f32 %v811, %v775
    %v813 = vsel %vm777, %v812, 0.0
    %814 = vadd.xlane.f32.xlu0 %v813
    %v815 = vpop.xlane.xlu0 %814
    %vm816 = vcmask 7168
    %v817 = vsel %vm816, %v780, %v785
    %vm818 = vcmask 15360
    %v819 = vsel %vm818, %v817, %v790
    %vm820 = vcmask 23552
    %v821 = vsel %vm820, %v819, %v795
    %vm822 = vcmask 31744
    %v823 = vsel %vm822, %v821, %v800
    %vm824 = vcmask 39936
    %v825 = vsel %vm824, %v823, %v805
    %vm826 = vcmask 48128
    %v827 = vsel %vm826, %v825, %v810
    %vm828 = vcmask 56320
    %v829 = vsel %vm828, %v827, %v815
    %v831 = vrot.slane %v51, 3
    %832 = vrot.lane.b32.xlu0 %v831, 64
    %v833 = vpop.permute.xlu0 %832
    %s834 = vtos %v833
    %v835 = vstv %s834
    %v837 = vadd.f32 %v829, %v835
    %vm838 = vcmask 58368
    %v839 = vsel %vm838, %v837, -inf
    %840 = vmax.xlane.f32.xlu0 %v839
    %v841 = vpop.xlane.xlu0 %840
    %v842 = vsub.f32 %v837, %v841
    %v843 = vmul.f32 %v842, 1.442695
    %v844 = vpow.pop %v843
    %v845 = vsel %vm838, %v844, 0.0
    %846 = vadd.xlane.f32.xlu0 %v845
    %v847 = vpop.xlane.xlu0 %846
    %v848 = vrcp.pop %v847
    %v849 = vmul.f32 %v844, %v848
    %851 = vset.pattern.permute.xlu0 0
    %852 = vperm.xlu0 %851, %v849
    %v853 = vpop.permute.xlu0 %852
    %v855 = vmul.f32 %v853, %v771
    %v856 = vadd.f32 %v855, 0.0
    %857 = vset.pattern.permute.xlu0 1
    %858 = vperm.xlu0 %857, %v849
    %v859 = vpop.permute.xlu0 %858
    %v861 = vmul.f32 %v859, %v781
    %v862 = vadd.f32 %v856, %v861
    %863 = vset.pattern.permute.xlu0 2
    %864 = vperm.xlu0 %863, %v849
    %v865 = vpop.permute.xlu0 %864
    %v867 = vmul.f32 %v865, %v786
    %v868 = vadd.f32 %v862, %v867
    %869 = vset.pattern.permute.xlu0 3
    %870 = vperm.xlu0 %869, %v849
    %v871 = vpop.permute.xlu0 %870
    %v873 = vmul.f32 %v871, %v791
    %v874 = vadd.f32 %v868, %v873
    %875 = vset.pattern.permute.xlu0 4
    %876 = vperm.xlu0 %875, %v849
    %v877 = vpop.permute.xlu0 %876
    %v879 = vmul.f32 %v877, %v796
    %v880 = vadd.f32 %v874, %v879
    %881 = vset.pattern.permute.xlu0 5
    %882 = vperm.xlu0 %881, %v849
    %v883 = vpop.permute.xlu0 %882
    %v885 = vmul.f32 %v883, %v801
    %v886 = vadd.f32 %v880, %v885
    %887 = vset.pattern.permute.xlu0 6
    %888 = vperm.xlu0 %887, %v849
    %v889 = vpop.permute.xlu0 %888
    %v891 = vmul.f32 %v889, %v806
    %v892 = vadd.f32 %v886, %v891
    %893 = vset.pattern.permute.xlu0 7
    %894 = vperm.xlu0 %893, %v849
    %v895 = vpop.permute.xlu0 %894
    %v897 = vmul.f32 %v895, %v811
    %v898 = vadd.f32 %v892, %v897
    %v899 = vlaneseq
    %v900 = vshrl.u32 %v899, 7
    %v901 = vsub.s32 4, %v900
    %v902 = vrot.slane %v51, %v901
    %v903 = vmul.f32 %v898, %v902
    %v904 = vsel %vm777, %v903, 0.0
    %905 = vadd.xlane.f32.xlu0 %v904
    %v906 = vpop.xlane.xlu0 %905
    %v907 = vadd.f32 %v906, %v902
    %v908 = vlaneseq
    %v909 = vshrl.u32 %v908, 7
    %v910 = vsub.s32 5, %v909
    %v911 = vrot.slane %v51, %v910
    %v912 = vmul.f32 %v898, %v911
    %v913 = vsel %vm777, %v912, 0.0
    %914 = vadd.xlane.f32.xlu0 %v913
    %v915 = vpop.xlane.xlu0 %914
    %v916 = vadd.f32 %v915, %v911
    %918 = vrot.lane.b32.xlu0 %v907, 64
    %v919 = vpop.permute.xlu0 %918
    %922 = vrot.lane.b32.xlu0 %v916, 65
    %v923 = vpop.permute.xlu0 %922
    %v925 = vsel %vm816, %v919, %v923
    %vm926 = vcmask 9216
    %927 = vst.msk [vmem:[#allocation7] sm:$0x3] %vm926, %v925
    // Predicated region
    $region22: #{stress_subtype_forward.1} parent=1 // pred_check
      _
    $region23: #{stress_subtype_forward.1} parent=1 // pred_check_branch
      %929 = sbr.rel (0) target = $region25
    $region24: #{stress_subtype_forward.1} parent=1 // pred_region
      %s931 = ssub.s32 32, 32
      %932 = vsyncadd [#allocation4], %s931
      %s934 = sshll.u32 [#allocation7], 4
      %s935 = int_to_ptr.vmem [resolvable:$true] %s934
      %937 = dma.vmem_to_hbm [thread:$0]  %s935, 32, %s3, [#allocation4]
    $region25: #{stress_subtype_forward.1} parent=1 // pred_fallthru
      _
    // Predicated region
    $region26: #{stress_subtype_forward.1} parent=1 // pred_check
      _
    $region27: #{stress_subtype_forward.1} parent=1 // pred_check_branch
      %939 = sbr.rel (0) target = $region29
    $region28: #{stress_subtype_forward.1} parent=1 // pred_region
      %940 = dma.done [#allocation4], 32
    $region29: #{stress_subtype_forward.1} parent=1 // pred_fallthru
      _
    %941 = vsyncpa [#allocation3], 1
    %942 = vsyncpa [#allocation6], 1
    %943 = vsyncpa [#allocation4], 1

</llo_original>
